<compile_context>
chip_gen: v7x
topology: tpu7x:2x2x1
jax: 0.10.0
libtpu: 0.0.40
codegen_flags: <defaults>
</compile_context>

<pallas_src>
import functools
import numpy as np
import jax
import jax.numpy as jnp
from jax import lax
from jax.experimental import pallas as pl
from jax.experimental.pallas import tpu as pltpu

_DEG2RAD = np.pi / 180.0


def _round_up(v, m):
    return ((v + m - 1) // m) * m


def _mixed_loss_kernel(x_ref, y_ref, eidx_ref, eattr_ref,
                       xym_ref, xys_ref, em_ref, es_ref,
                       out_ref, nef_ref, agg_ref, *, alpha, num_nodes):
    step = pl.program_id(0)
    n_pad = x_ref.shape[1]          # padded node count (lane axis)
    n_feat = x_ref.shape[0]         # 6
    te = eidx_ref.shape[1]          # edge tile size (lane axis)
    hi = jax.lax.Precision.HIGHEST

    # ---- once: per-node de-normalize + trig -> [e; f] table, zero accumulator
    @pl.when(step == 0)
    def _init():
        x_vmva = x_ref[0:2, :] * xys_ref[0:2, :] + xym_ref[0:2, :]   # (2, Np)
        vm = x_vmva[0:1, :]
        va = x_vmva[1:2, :] * _DEG2RAD
        nef_ref[0:1, :] = vm * jnp.cos(va)
        nef_ref[1:2, :] = vm * jnp.sin(va)
        agg_ref[...] = jnp.zeros_like(agg_ref)
        out_ref[...] = jnp.zeros_like(out_ref)

    # ---- per edge tile: lane-dense message math (edges on lanes) ----
    ea = eattr_ref[...] * es_ref[...] + em_ref[...]      # (2, TE) de-normalized
    r = ea[0:1, :]
    xr = ea[1:2, :]
    denom = r * r + xr * xr          # NOTE: no eps guard -- matches reference
    g = r / denom
    b = -xr / denom

    src = eidx_ref[0:1, :]           # (1, TE) int32 (edge_index[0]; padded = -1)
    dst = eidx_ref[1:2, :]           # (1, TE) int32 (edge_index[1])
    node_iota = lax.broadcasted_iota(jnp.int32, (n_pad, te), 0)
    oh_src = (node_iota == src).astype(jnp.float32)      # (Np, TE)
    oh_dst = (node_iota == dst).astype(jnp.float32)      # (Np, TE)

    nef = nef_ref[...]                                   # (2, Np) = [e; f]
    ef_i = jnp.dot(nef, oh_src, precision=hi,
                   preferred_element_type=jnp.float32)   # (2, TE)
    ef_j = jnp.dot(nef, oh_dst, precision=hi,
                   preferred_element_type=jnp.float32)   # (2, TE)
    e_i, f_i = ef_i[0:1, :], ef_i[1:2, :]
    e_j, f_j = ef_j[0:1, :], ef_j[1:2, :]

    # Algebraic simplification:  e_i^2 + f_i^2 == vm_i^2, shared sub-expressions.
    dotp = e_i * e_j + f_i * f_j
    cross = f_i * e_j - e_i * f_j
    vm2_i = e_i * e_i + f_i * f_i
    t = dotp - vm2_i
    p_ji = g * t + b * cross                             # (1, TE)
    q_ji = g * cross - b * t                             # (1, TE)
    pq = jnp.concatenate([p_ji, q_ji], axis=0)           # (2, TE)

    # ---- fused scatter-add at src: contract over edges, no explicit transpose
    dims = (((1,), (1,)), ((), ()))
    agg_ref[...] += lax.dot_general(pq, oh_src, dims, precision=hi,
                                    preferred_element_type=jnp.float32)

    # ---- finalize: power imbalance + MSE -> scalar loss ----
    @pl.when(step == pl.num_programs(0) - 1)
    def _fin():
        x_pq = x_ref[2:4, :] * xys_ref[2:4, :] + xym_ref[2:4, :]     # (2, Np)
        d = x_pq - agg_ref[...]                                      # [dPi; dQi]
        mask = lax.broadcasted_iota(jnp.int32, (1, n_pad), 1) < num_nodes
        dpq = d[0:1, :] * d[0:1, :] + d[1:2, :] * d[1:2, :]
        power_imb = jnp.sum(jnp.where(mask, dpq, 0.0)) / num_nodes

        diff = x_ref[...] - y_ref[...]       # padded cols are 0 in both x and y
        mse = jnp.sum(diff * diff) / (num_nodes * n_feat)

        loss = alpha * mse + (1.0 - alpha) * 0.02 * power_imb
        out_ref[...] = loss * jnp.ones((1, 1), jnp.float32)


def mixed_mse_power_imbalance(x, edge_index, edge_attr, y,
                              xymean, xystd, edgemean, edgestd,
                              alpha=0.5, edge_tile=512):
    """Host wrapper. x,y: (N,6); edge_index: (2,E) int; edge_attr: (E,2)."""
    x = np.asarray(x, np.float32)
    y = np.asarray(y, np.float32)
    ei = np.asarray(edge_index)
    ea = np.asarray(edge_attr, np.float32)

    # is_directed + undirect_graph: data-dependent output shape -> host glue.
    # TODO(synk): shape-changing edge duplication cannot live in a fixed-shape kernel.
    sel = ei[1, ei[0, :] == ei[1, 0]]
    if ei[0, 0] not in sel:
        ei = np.concatenate([ei, ei[::-1, :]], axis=1)
        ea = np.concatenate([ea, ea], axis=0)

    N, F = x.shape
    E = ei.shape[1]

    def _col(stat, n):
        s = np.asarray(stat, np.float32)
        if s.ndim == 1:
            s = s[None, :]
        return np.ascontiguousarray(s[0:1, :n].T)        # (n, 1)

    xym = _col(xymean, F)
    xys = _col(xystd, F)
    em = _col(edgemean, 2)
    es = _col(edgestd, 2)

    n_pad = _round_up(max(N, 1), 128)
    te = min(int(edge_tile), _round_up(max(E, 1), 128))  # multiple of 128 (MXU-friendly)
    e_pad = _round_up(max(E, 1), te)

    # Node features feature-major (F, Npad), nodes on lanes. Zero padding is
    # harmless: padded nodes receive no edges and are masked in the reduction.
    x_t = np.zeros((F, n_pad), np.float32); x_t[:, :N] = x.T
    y_t = np.zeros((F, n_pad), np.float32); y_t[:, :N] = y.T

    # Edge index (2, Epad) int32, padded with -1 (matches no node -> zero message).
    eidx = np.full((2, e_pad), -1, np.int32); eidx[:, :E] = ei.astype(np.int32)

    # Edge attr (2, Epad) edge-on-lanes; pad so de-normalized (r, x) = (1, 0)
    # so r/(r^2+x^2) stays finite on padded lanes (their message is 0 anyway).
    es_safe = np.where(np.abs(es[:, 0]) > 0.0, es[:, 0], 1.0)
    eattr = np.empty((2, e_pad), np.float32)
    eattr[0, :] = (1.0 - em[0, 0]) / es_safe[0]
    eattr[1, :] = (0.0 - em[1, 0]) / es_safe[1]
    eattr[:, :E] = ea.T

    grid = (e_pad // te,)
    kernel = functools.partial(_mixed_loss_kernel, alpha=float(alpha),
                               num_nodes=int(N))

    out = pl.pallas_call(
        kernel,
        out_shape=jax.ShapeDtypeStruct((1, 1), jnp.float32),
        grid_spec=pltpu.PrefetchScalarGridSpec(
            num_scalar_prefetch=0,
            grid=grid,
            in_specs=[
                pl.BlockSpec((F, n_pad), lambda i: (0, 0)),   # x (feature-major)
                pl.BlockSpec((F, n_pad), lambda i: (0, 0)),   # y
                pl.BlockSpec((2, te), lambda i: (0, i)),      # edge_index tile
                pl.BlockSpec((2, te), lambda i: (0, i)),      # edge_attr tile
                pl.BlockSpec((F, 1), lambda i: (0, 0)),       # xymean
                pl.BlockSpec((F, 1), lambda i: (0, 0)),       # xystd
                pl.BlockSpec((2, 1), lambda i: (0, 0)),       # edgemean
                pl.BlockSpec((2, 1), lambda i: (0, 0)),       # edgestd
            ],
            out_specs=pl.BlockSpec((1, 1), lambda i: (0, 0)),
            scratch_shapes=[pltpu.VMEM((2, n_pad), jnp.float32),   # per-node [e; f]
                            pltpu.VMEM((2, n_pad), jnp.float32)],  # agg [P; Q]
        ),
        compiler_params=pltpu.CompilerParams(
            dimension_semantics=("arbitrary",),
            vmem_limit_bytes=32 * 1024 * 1024),
    )(jnp.asarray(x_t), jnp.asarray(y_t), jnp.asarray(eidx), jnp.asarray(eattr),
      jnp.asarray(xym), jnp.asarray(xys), jnp.asarray(em), jnp.asarray(es))
    return out[0, 0]


def _reference_numpy(x, ei, ea, y, xymean, xystd, emean, estd, alpha):
    """Pure numpy reference matching the PyTorch forward (sanity check)."""
    x = np.asarray(x, np.float64); y = np.asarray(y, np.float64)
    ei = np.asarray(ei); ea = np.asarray(ea, np.float64)
    sel = ei[1, ei[0, :] == ei[1, 0]]
    if ei[0, 0] not in sel:
        ei = np.concatenate([ei, ei[::-1, :]], axis=1)
        ea = np.concatenate([ea, ea], axis=0)
    x_dn = x * np.asarray(xystd, np.float64) + np.asarray(xymean, np.float64)
    ea_dn = ea * np.asarray(estd, np.float64) + np.asarray(emean, np.float64)
    src, dst = ei[0], ei[1]
    x_i, x_j = x_dn[src], x_dn[dst]
    r, xr = ea_dn[:, 0:1], ea_dn[:, 1:2]
    g = r / (r ** 2 + xr ** 2)
    b = -xr / (r ** 2 + xr ** 2)
    vm_i, va_i = x_i[:, 0:1], np.pi / 180.0 * x_i[:, 1:2]
    vm_j, va_j = x_j[:, 0:1], np.pi / 180.0 * x_j[:, 1:2]
    e_i, f_i = vm_i * np.cos(va_i), vm_i * np.sin(va_i)
    e_j, f_j = vm_j * np.cos(va_j), vm_j * np.sin(va_j)
    P = g * (e_i * e_j - e_i ** 2 + f_i * f_j - f_i ** 2) + b * (f_i * e_j - e_i * f_j)
    Q = g * (f_i * e_j - e_i * f_j) + b * (-e_i * e_j + e_i ** 2 - f_i * f_j + f_i ** 2)
    msg = np.concatenate([P, Q], axis=-1)
    agg = np.zeros((x.shape[0], 2))
    np.add.at(agg, src, msg)
    dPi = -agg[:, 0] + x_dn[:, 2]
    dQi = -agg[:, 1] + x_dn[:, 3]
    pimb = np.mean(dPi ** 2 + dQi ** 2)
    mse = np.mean((x - y) ** 2)
    return alpha * mse + (1 - alpha) * 0.02 * pimb


if __name__ == "__main__":
    N, F, E = 16, 6, 24
    key = jax.random.PRNGKey(0)
    kx, ky, ke = jax.random.split(key, 3)

    x = jax.random.normal(kx, (N, F), dtype=jnp.float32)
    y = jax.random.normal(ky, (N, F), dtype=jnp.float32)
    edge_attr = jax.random.normal(ke, (E, 2), dtype=jnp.float32)

    # Deterministic directed edge list (no reverse edges -> triggers undirect_graph).
    src = np.arange(E, dtype=np.int32) % N
    dst = (src + 3) % N
    edge_index = np.stack([src, dst], axis=0)            # (2, E)

    # Deterministic "normalization statistics" (module __init__ parameters).
    xymean = (0.1 * np.arange(F, dtype=np.float32)).reshape(1, F)
    xystd = (1.0 + 0.05 * np.arange(F, dtype=np.float32)).reshape(1, F)
    edgemean = np.array([[0.5, 0.6]], dtype=np.float32)
    edgestd = np.array([[0.1, 0.1]], dtype=np.float32)
    alpha = 0.5

    loss = mixed_mse_power_imbalance(x, edge_index, edge_attr, y,
                                     xymean, xystd, edgemean, edgestd, alpha)
    loss = jax.block_until_ready(loss)

    ref = _reference_numpy(np.asarray(x), edge_index, np.asarray(edge_attr),
                           np.asarray(y), xymean, xystd, edgemean, edgestd, alpha)
    np.testing.assert_allclose(np.asarray(loss), ref, rtol=2e-4, atol=1e-5)
    print("KERNEL_OK")
</pallas_src>

<mosaic_0001>
module attributes {stable_mosaic.version = 11 : i64} {
  func.func @_mixed_loss_kernel(%arg0: i32, %arg1: memref<6x128xf32, #tpu.memory_space<vmem>>, %arg2: memref<6x128xf32, #tpu.memory_space<vmem>>, %arg3: memref<2x128xi32, #tpu.memory_space<vmem>>, %arg4: memref<2x128xf32, #tpu.memory_space<vmem>>, %arg5: memref<6x1xf32, #tpu.memory_space<vmem>>, %arg6: memref<6x1xf32, #tpu.memory_space<vmem>>, %arg7: memref<2x1xf32, #tpu.memory_space<vmem>>, %arg8: memref<2x1xf32, #tpu.memory_space<vmem>>, %arg9: memref<1x1xf32, #tpu.memory_space<vmem>>, %arg10: memref<2x128xf32, #tpu.memory_space<vmem>>, %arg11: memref<2x128xf32, #tpu.memory_space<vmem>>) attributes {dimension_semantics = [#tpu.dimension_semantics<arbitrary>], iteration_bounds = array<i64: 1>, scalar_prefetch = 0 : i64, scratch_operands = 2 : i64, tpu.core_type = #tpu.core_type<tc>, window_params = [{pipeline_mode = #tpu.pipeline_mode<synchronous>, transform_indices = @transform_0, window_bounds = array<i64: 6, 128>}, {pipeline_mode = #tpu.pipeline_mode<synchronous>, transform_indices = @transform_1, window_bounds = array<i64: 6, 128>}, {transform_indices = @transform_2, window_bounds = array<i64: 2, 128>}, {transform_indices = @transform_3, window_bounds = array<i64: 2, 128>}, {pipeline_mode = #tpu.pipeline_mode<synchronous>, transform_indices = @transform_4, window_bounds = array<i64: 6, 1>}, {pipeline_mode = #tpu.pipeline_mode<synchronous>, transform_indices = @transform_5, window_bounds = array<i64: 6, 1>}, {pipeline_mode = #tpu.pipeline_mode<synchronous>, transform_indices = @transform_6, window_bounds = array<i64: 2, 1>}, {pipeline_mode = #tpu.pipeline_mode<synchronous>, transform_indices = @transform_7, window_bounds = array<i64: 2, 1>}, {pipeline_mode = #tpu.pipeline_mode<synchronous>, transform_indices = @transform_8, window_bounds = array<i64: 1, 1>}]} {
    %c0_i32 = arith.constant 0 : i32
    %0 = arith.cmpi eq, %arg0, %c0_i32 : i32
    %1 = arith.extui %0 : i1 to i32
    %c0_i32_0 = arith.constant 0 : i32
    %2 = arith.cmpi ne, %1, %c0_i32_0 : i32
    scf.if %2 {
      %c0_20 = arith.constant 0 : index
      %c0_21 = arith.constant 0 : index
      %61 = vector.load %arg1[%c0_20, %c0_21] : memref<6x128xf32, #tpu.memory_space<vmem>>, vector<2x128xf32>
      %c0_22 = arith.constant 0 : index
      %c0_23 = arith.constant 0 : index
      %62 = vector.load %arg6[%c0_22, %c0_23] : memref<6x1xf32, #tpu.memory_space<vmem>>, vector<2x1xf32>
      %63 = vector.broadcast %62 : vector<2x1xf32> to vector<2x128xf32>
      %64 = arith.mulf %61, %63 : vector<2x128xf32>
      %c0_24 = arith.constant 0 : index
      %c0_25 = arith.constant 0 : index
      %65 = vector.load %arg5[%c0_24, %c0_25] : memref<6x1xf32, #tpu.memory_space<vmem>>, vector<2x1xf32>
      %66 = vector.broadcast %65 : vector<2x1xf32> to vector<2x128xf32>
      %67 = arith.addf %64, %66 : vector<2x128xf32>
      %68 = vector.extract_strided_slice %67 {offsets = [0, 0], sizes = [1, 128], strides = [1, 1]} : vector<2x128xf32> to vector<1x128xf32>
      %69 = vector.extract_strided_slice %67 {offsets = [1, 0], sizes = [1, 128], strides = [1, 1]} : vector<2x128xf32> to vector<1x128xf32>
      %cst_26 = arith.constant 0.0174532924 : f32
      %70 = vector.broadcast %cst_26 : f32 to vector<1x128xf32>
      %71 = arith.mulf %69, %70 : vector<1x128xf32>
      %72 = math.cos %71 : vector<1x128xf32>
      %73 = arith.mulf %68, %72 : vector<1x128xf32>
      %c0_27 = arith.constant 0 : index
      %c0_28 = arith.constant 0 : index
      %74 = vector.load %arg10[%c0_27, %c0_28] : memref<2x128xf32, #tpu.memory_space<vmem>>, vector<1x128xf32>
      tpu.vector_store %arg10[%c0_27, %c0_28], %73 {strides = array<i32>} : memref<2x128xf32, #tpu.memory_space<vmem>>, vector<1x128xf32>,
      %75 = math.sin %71 : vector<1x128xf32>
      %76 = arith.mulf %68, %75 : vector<1x128xf32>
      %c1_29 = arith.constant 1 : index
      %c0_30 = arith.constant 0 : index
      %77 = vector.load %arg10[%c1_29, %c0_30] : memref<2x128xf32, #tpu.memory_space<vmem>>, vector<1x128xf32>
      tpu.vector_store %arg10[%c1_29, %c0_30], %76 {strides = array<i32>} : memref<2x128xf32, #tpu.memory_space<vmem>>, vector<1x128xf32>,
      %cst_31 = arith.constant 0.000000e+00 : f32
      %78 = vector.broadcast %cst_31 : f32 to vector<2x128xf32>
      %c0_32 = arith.constant 0 : index
      %c0_33 = arith.constant 0 : index
      %79 = vector.load %arg11[%c0_32, %c0_33] : memref<2x128xf32, #tpu.memory_space<vmem>>, vector<2x128xf32>
      tpu.vector_store %arg11[%c0_32, %c0_33], %78 {strides = array<i32>} : memref<2x128xf32, #tpu.memory_space<vmem>>, vector<2x128xf32>,
      %cst_34 = arith.constant 0.000000e+00 : f32
      %80 = vector.broadcast %cst_34 : f32 to vector<1x1xf32>
      %c0_35 = arith.constant 0 : index
      %c0_36 = arith.constant 0 : index
      %81 = vector.load %arg9[%c0_35, %c0_36] : memref<1x1xf32, #tpu.memory_space<vmem>>, vector<1x1xf32>
      tpu.vector_store %arg9[%c0_35, %c0_36], %80 {strides = array<i32>} : memref<1x1xf32, #tpu.memory_space<vmem>>, vector<1x1xf32>,
    } else {
    }
    %c0 = arith.constant 0 : index
    %c0_1 = arith.constant 0 : index
    %3 = vector.load %arg4[%c0, %c0_1] : memref<2x128xf32, #tpu.memory_space<vmem>>, vector<2x128xf32>
    %c0_2 = arith.constant 0 : index
    %c0_3 = arith.constant 0 : index
    %4 = vector.load %arg8[%c0_2, %c0_3] : memref<2x1xf32, #tpu.memory_space<vmem>>, vector<2x1xf32>
    %5 = vector.broadcast %4 : vector<2x1xf32> to vector<2x128xf32>
    %6 = arith.mulf %3, %5 : vector<2x128xf32>
    %c0_4 = arith.constant 0 : index
    %c0_5 = arith.constant 0 : index
    %7 = vector.load %arg7[%c0_4, %c0_5] : memref<2x1xf32, #tpu.memory_space<vmem>>, vector<2x1xf32>
    %8 = vector.broadcast %7 : vector<2x1xf32> to vector<2x128xf32>
    %9 = arith.addf %6, %8 : vector<2x128xf32>
    %10 = vector.extract_strided_slice %9 {offsets = [0, 0], sizes = [1, 128], strides = [1, 1]} : vector<2x128xf32> to vector<1x128xf32>
    %11 = vector.extract_strided_slice %9 {offsets = [1, 0], sizes = [1, 128], strides = [1, 1]} : vector<2x128xf32> to vector<1x128xf32>
    %12 = arith.mulf %10, %10 : vector<1x128xf32>
    %13 = arith.mulf %11, %11 : vector<1x128xf32>
    %14 = arith.addf %12, %13 : vector<1x128xf32>
    %15 = arith.divf %10, %14 : vector<1x128xf32>
    %cst = arith.constant 0.000000e+00 : f32
    %16 = vector.broadcast %cst : f32 to vector<1x128xf32>
    %17 = arith.subf %16, %11 : vector<1x128xf32>
    %18 = arith.divf %17, %14 : vector<1x128xf32>
    %c0_6 = arith.constant 0 : index
    %c0_7 = arith.constant 0 : index
    %19 = vector.load %arg3[%c0_6, %c0_7] : memref<2x128xi32, #tpu.memory_space<vmem>>, vector<1x128xi32>
    %c1 = arith.constant 1 : index
    %c0_8 = arith.constant 0 : index
    %20 = vector.load %arg3[%c1, %c0_8] : memref<2x128xi32, #tpu.memory_space<vmem>>, vector<1x128xi32>
    %21 = tpu.iota {dimensions = array<i32: 0>} : vector<128x128xi32>
    %22 = vector.broadcast %19 : vector<1x128xi32> to vector<128x128xi32>
    %23 = arith.cmpi eq, %21, %22 : vector<128x128xi32>
    %24 = arith.extui %23 : vector<128x128xi1> to vector<128x128xi32>
    %25 = arith.sitofp %24 : vector<128x128xi32> to vector<128x128xf32>
    %26 = vector.broadcast %20 : vector<1x128xi32> to vector<128x128xi32>
    %27 = arith.cmpi eq, %21, %26 : vector<128x128xi32>
    %28 = arith.extui %27 : vector<128x128xi1> to vector<128x128xi32>
    %29 = arith.sitofp %28 : vector<128x128xi32> to vector<128x128xf32>
    %c0_9 = arith.constant 0 : index
    %c0_10 = arith.constant 0 : index
    %30 = vector.load %arg10[%c0_9, %c0_10] : memref<2x128xf32, #tpu.memory_space<vmem>>, vector<2x128xf32>
    %cst_11 = arith.constant dense<0.000000e+00> : vector<2x128xf32>
    %31 = tpu.matmul %30, %25, %cst_11 {dimension_numbers = #tpu.dot_dimension_numbers<[1], [0], [0], [1], [0, 0, 1, 1], [], []>, precision = #tpu.contract_precision<fp32>} : vector<2x128xf32>, vector<128x128xf32>, vector<2x128xf32> -> vector<2x128xf32>
    %cst_12 = arith.constant dense<0.000000e+00> : vector<2x128xf32>
    %32 = tpu.matmul %30, %29, %cst_12 {dimension_numbers = #tpu.dot_dimension_numbers<[1], [0], [0], [1], [0, 0, 1, 1], [], []>, precision = #tpu.contract_precision<fp32>} : vector<2x128xf32>, vector<128x128xf32>, vector<2x128xf32> -> vector<2x128xf32>
    %33 = vector.extract_strided_slice %31 {offsets = [0, 0], sizes = [1, 128], strides = [1, 1]} : vector<2x128xf32> to vector<1x128xf32>
    %34 = vector.extract_strided_slice %31 {offsets = [1, 0], sizes = [1, 128], strides = [1, 1]} : vector<2x128xf32> to vector<1x128xf32>
    %35 = vector.extract_strided_slice %32 {offsets = [0, 0], sizes = [1, 128], strides = [1, 1]} : vector<2x128xf32> to vector<1x128xf32>
    %36 = vector.extract_strided_slice %32 {offsets = [1, 0], sizes = [1, 128], strides = [1, 1]} : vector<2x128xf32> to vector<1x128xf32>
    %37 = arith.mulf %33, %35 : vector<1x128xf32>
    %38 = arith.mulf %34, %36 : vector<1x128xf32>
    %39 = arith.addf %37, %38 : vector<1x128xf32>
    %40 = arith.mulf %34, %35 : vector<1x128xf32>
    %41 = arith.mulf %33, %36 : vector<1x128xf32>
    %42 = arith.subf %40, %41 : vector<1x128xf32>
    %43 = arith.mulf %33, %33 : vector<1x128xf32>
    %44 = arith.mulf %34, %34 : vector<1x128xf32>
    %45 = arith.addf %43, %44 : vector<1x128xf32>
    %46 = arith.subf %39, %45 : vector<1x128xf32>
    %47 = arith.mulf %15, %46 : vector<1x128xf32>
    %48 = arith.mulf %18, %42 : vector<1x128xf32>
    %49 = arith.addf %47, %48 : vector<1x128xf32>
    %50 = arith.mulf %15, %42 : vector<1x128xf32>
    %51 = arith.mulf %18, %46 : vector<1x128xf32>
    %52 = arith.subf %50, %51 : vector<1x128xf32>
    %53 = tpu.concatenate %49, %52 in 0 : vector<1x128xf32>, vector<1x128xf32> -> vector<2x128xf32>
    %c0_13 = arith.constant 0 : index
    %c0_14 = arith.constant 0 : index
    %54 = vector.load %arg11[%c0_13, %c0_14] : memref<2x128xf32, #tpu.memory_space<vmem>>, vector<2x128xf32>
    %cst_15 = arith.constant dense<0.000000e+00> : vector<2x128xf32>
    %55 = tpu.matmul %53, %25, %cst_15 {dimension_numbers = #tpu.dot_dimension_numbers<[1], [1], [0], [0], [0, 0, 1, 0], [], []>, precision = #tpu.contract_precision<fp32>} : vector<2x128xf32>, vector<128x128xf32>, vector<2x128xf32> -> vector<2x128xf32>
    %56 = arith.addf %54, %55 : vector<2x128xf32>
    %c0_16 = arith.constant 0 : index
    %c0_17 = arith.constant 0 : index
    %57 = vector.load %arg11[%c0_16, %c0_17] : memref<2x128xf32, #tpu.memory_space<vmem>>, vector<2x128xf32>
    tpu.vector_store %arg11[%c0_16, %c0_17], %56 {strides = array<i32>} : memref<2x128xf32, #tpu.memory_space<vmem>>, vector<2x128xf32>,
    %c0_i32_18 = arith.constant 0 : i32
    %58 = arith.cmpi eq, %arg0, %c0_i32_18 : i32
    %59 = arith.extui %58 : i1 to i32
    %c0_i32_19 = arith.constant 0 : i32
    %60 = arith.cmpi ne, %59, %c0_i32_19 : i32
    scf.if %60 {
      %c2 = arith.constant 2 : index
      %c0_20 = arith.constant 0 : index
      %61 = vector.load %arg1[%c2, %c0_20] : memref<6x128xf32, #tpu.memory_space<vmem>>, vector<2x128xf32>
      %c2_21 = arith.constant 2 : index
      %c0_22 = arith.constant 0 : index
      %62 = vector.load %arg6[%c2_21, %c0_22] : memref<6x1xf32, #tpu.memory_space<vmem>>, vector<2x1xf32>
      %63 = vector.broadcast %62 : vector<2x1xf32> to vector<2x128xf32>
      %64 = arith.mulf %61, %63 : vector<2x128xf32>
      %c2_23 = arith.constant 2 : index
      %c0_24 = arith.constant 0 : index
      %65 = vector.load %arg5[%c2_23, %c0_24] : memref<6x1xf32, #tpu.memory_space<vmem>>, vector<2x1xf32>
      %66 = vector.broadcast %65 : vector<2x1xf32> to vector<2x128xf32>
      %67 = arith.addf %64, %66 : vector<2x128xf32>
      %c0_25 = arith.constant 0 : index
      %c0_26 = arith.constant 0 : index
      %68 = vector.load %arg11[%c0_25, %c0_26] : memref<2x128xf32, #tpu.memory_space<vmem>>, vector<2x128xf32>
      %69 = arith.subf %67, %68 : vector<2x128xf32>
      %70 = tpu.iota {dimensions = array<i32: 1>} : vector<1x128xi32>
      %c16_i32 = arith.constant 16 : i32
      %71 = vector.broadcast %c16_i32 : i32 to vector<1x128xi32>
      %72 = arith.cmpi slt, %70, %71 : vector<1x128xi32>
      %73 = vector.extract_strided_slice %69 {offsets = [0, 0], sizes = [1, 128], strides = [1, 1]} : vector<2x128xf32> to vector<1x128xf32>
      %74 = vector.extract_strided_slice %69 {offsets = [0, 0], sizes = [1, 128], strides = [1, 1]} : vector<2x128xf32> to vector<1x128xf32>
      %75 = arith.mulf %73, %74 : vector<1x128xf32>
      %76 = vector.extract_strided_slice %69 {offsets = [1, 0], sizes = [1, 128], strides = [1, 1]} : vector<2x128xf32> to vector<1x128xf32>
      %77 = vector.extract_strided_slice %69 {offsets = [1, 0], sizes = [1, 128], strides = [1, 1]} : vector<2x128xf32> to vector<1x128xf32>
      %78 = arith.mulf %76, %77 : vector<1x128xf32>
      %79 = arith.addf %75, %78 : vector<1x128xf32>
      %cst_27 = arith.constant 0.000000e+00 : f32
      %80 = vector.broadcast %cst_27 : f32 to vector<1x128xf32>
      %81 = arith.select %72, %79, %80 : vector<1x128xi1>, vector<1x128xf32>
      %82 = vector.shape_cast %81 : vector<1x128xf32> to vector<1x1x128xf32>
      %cst_28 = arith.constant dense<0.000000e+00> : vector<1xf32>
      %83 = vector.multi_reduction <add>, %82, %cst_28 [1, 2] : vector<1x1x128xf32> to vector<1xf32>
      %84 = vector.shape_cast %83 : vector<1xf32> to vector<1x1x1xf32>
      %85 = vector.extract %84[0, 0, 0] : f32 from vector<1x1x1xf32>
      %cst_29 = arith.constant 1.600000e+01 : f32
      %86 = arith.divf %85, %cst_29 : f32
      %c0_30 = arith.constant 0 : index
      %c0_31 = arith.constant 0 : index
      %87 = vector.load %arg1[%c0_30, %c0_31] : memref<6x128xf32, #tpu.memory_space<vmem>>, vector<6x128xf32>
      %c0_32 = arith.constant 0 : index
      %c0_33 = arith.constant 0 : index
      %88 = vector.load %arg2[%c0_32, %c0_33] : memref<6x128xf32, #tpu.memory_space<vmem>>, vector<6x128xf32>
      %89 = arith.subf %87, %88 : vector<6x128xf32>
      %90 = arith.mulf %89, %89 : vector<6x128xf32>
      %91 = vector.shape_cast %90 : vector<6x128xf32> to vector<1x6x128xf32>
      %cst_34 = arith.constant dense<0.000000e+00> : vector<1xf32>
      %92 = vector.multi_reduction <add>, %91, %cst_34 [1, 2] : vector<1x6x128xf32> to vector<1xf32>
      %93 = vector.shape_cast %92 : vector<1xf32> to vector<1x1x1xf32>
      %94 = vector.extract %93[0, 0, 0] : f32 from vector<1x1x1xf32>
      %cst_35 = arith.constant 9.600000e+01 : f32
      %95 = arith.divf %94, %cst_35 : f32
      %cst_36 = arith.constant 5.000000e-01 : f32
      %96 = arith.mulf %cst_36, %95 : f32
      %cst_37 = arith.constant 0.00999999977 : f32
      %97 = arith.mulf %cst_37, %86 : f32
      %98 = arith.addf %96, %97 : f32
      %cst_38 = arith.constant 1.000000e+00 : f32
      %99 = vector.broadcast %cst_38 : f32 to vector<1x1xf32>
      %100 = vector.broadcast %98 : f32 to vector<1x1xf32>
      %101 = arith.mulf %100, %99 : vector<1x1xf32>
      %c0_39 = arith.constant 0 : index
      %c0_40 = arith.constant 0 : index
      %102 = vector.load %arg9[%c0_39, %c0_40] : memref<1x1xf32, #tpu.memory_space<vmem>>, vector<1x1xf32>
      tpu.vector_store %arg9[%c0_39, %c0_40], %101 {strides = array<i32>} : memref<1x1xf32, #tpu.memory_space<vmem>>, vector<1x1xf32>,
    } else {
    }
    return
  }
  func.func @transform_0(%arg0: i32) -> (i32, i32) {
    %c0_i32 = arith.constant 0 : i32
    %c0_i32_0 = arith.constant 0 : i32
    %c0_i32_1 = arith.constant 0 : i32
    return %c0_i32, %c0_i32_0 : i32, i32
  }
  func.func @transform_1(%arg0: i32) -> (i32, i32) {
    %c0_i32 = arith.constant 0 : i32
    %c0_i32_0 = arith.constant 0 : i32
    %c0_i32_1 = arith.constant 0 : i32
    return %c0_i32, %c0_i32_0 : i32, i32
  }
  func.func @transform_2(%arg0: i32) -> (i32, i32) {
    %c0_i32 = arith.constant 0 : i32
    %c0_i32_0 = arith.constant 0 : i32
    return %c0_i32, %arg0 : i32, i32
  }
  func.func @transform_3(%arg0: i32) -> (i32, i32) {
    %c0_i32 = arith.constant 0 : i32
    %c0_i32_0 = arith.constant 0 : i32
    return %c0_i32, %arg0 : i32, i32
  }
  func.func @transform_4(%arg0: i32) -> (i32, i32) {
    %c0_i32 = arith.constant 0 : i32
    %c0_i32_0 = arith.constant 0 : i32
    %c0_i32_1 = arith.constant 0 : i32
    return %c0_i32, %c0_i32_0 : i32, i32
  }
  func.func @transform_5(%arg0: i32) -> (i32, i32) {
    %c0_i32 = arith.constant 0 : i32
    %c0_i32_0 = arith.constant 0 : i32
    %c0_i32_1 = arith.constant 0 : i32
    return %c0_i32, %c0_i32_0 : i32, i32
  }
  func.func @transform_6(%arg0: i32) -> (i32, i32) {
    %c0_i32 = arith.constant 0 : i32
    %c0_i32_0 = arith.constant 0 : i32
    %c0_i32_1 = arith.constant 0 : i32
    return %c0_i32, %c0_i32_0 : i32, i32
  }
  func.func @transform_7(%arg0: i32) -> (i32, i32) {
    %c0_i32 = arith.constant 0 : i32
    %c0_i32_0 = arith.constant 0 : i32
    %c0_i32_1 = arith.constant 0 : i32
    return %c0_i32, %c0_i32_0 : i32, i32
  }
  func.func @transform_8(%arg0: i32) -> (i32, i32) {
    %c0_i32 = arith.constant 0 : i32
    %c0_i32_0 = arith.constant 0 : i32
    %c0_i32_1 = arith.constant 0 : i32
    return %c0_i32, %c0_i32_0 : i32, i32
  }
}

</mosaic_0001>

<llo_original>
// kernel: tpu_custom_call.1
$region0: #{tpu_custom_call.1}
  #allocation0 [shape = 'u32[]', space=smem, size = 0x4, offset = 0x4, fixed_abs, tag = 'smem constant byte address 0x4 - core index']
  #allocation1 [shape = 'u32[144,128]{1,0:T(1,128)}', space=vmem, size = 0x12000, scoped, tag = 'internal scratch']
  #allocation2 [shape = 'f32[2,128]{1,0:T(2,128)}', space=vmem, size = 0x400, scoped, tag = 'scratch operand']
  #allocation3 [shape = 'f32[2,128]{1,0:T(2,128)}', space=vmem, size = 0x400, scoped, tag = 'scratch operand']
  %s0 = inlined_call_operand.vmem [shape: f32[6,128], index: 0, kind: input, shape index: {}]
  %s1 = inlined_call_operand.vmem [shape: f32[6,128], index: 1, kind: input, shape index: {}]
  %s2 = inlined_call_operand.vmem [shape: s32[2,128], index: 2, kind: input, shape index: {}]
  %s3 = inlined_call_operand.vmem [shape: f32[2,128], index: 3, kind: input, shape index: {}]
  %s4 = inlined_call_operand.vmem [shape: f32[6,1], index: 4, kind: input, shape index: {}]
  %s5 = inlined_call_operand.vmem [shape: f32[6,1], index: 5, kind: input, shape index: {}]
  %s6 = inlined_call_operand.vmem [shape: f32[2,1], index: 6, kind: input, shape index: {}]
  %s7 = inlined_call_operand.vmem [shape: f32[2,1], index: 7, kind: input, shape index: {}]
  %s8 = inlined_call_operand.hbm [shape: f32[1,1], index: 8, kind: output, shape index: {}]
  %s9 = sld [smem:[#allocation0]]
  $region50: #{tpu_custom_call.1} parent=0
    _
  %s11 = ssub.s32 1, %s9
  %s12 = scalar_select 0, %s11, %s9
  $region1: #{tpu_custom_call.1} parent=0
    #allocation4 [shape = 'u8[512]{0}', space=vmem, size = 0x400, scoped, tag = 'output window, operand 0, single buffered']
    #allocation5 [shape = 's32[1]{0}', space=sflag, size = 0x4, scoped, tag = 'scoped memory for tpu_custom_call.1']
    %13 = vsyncpa [#allocation5], 0
    // Predicated region
    $region2: #{tpu_custom_call.1} parent=1 // pred_check
      _
    $region3: #{tpu_custom_call.1} parent=1 // pred_check_branch
      %15 = sbr.rel (0) target = $region5
    $region4: #{tpu_custom_call.1} parent=1 // pred_region
      _
    $region5: #{tpu_custom_call.1} parent=1 // pred_fallthru
      _
    // Predicated region
    $region6: #{tpu_custom_call.1} parent=1 // pred_check
      _
    $region7: #{tpu_custom_call.1} parent=1 // pred_check_branch
      %17 = sbr.rel (0) target = $region9
    $region8: #{tpu_custom_call.1} parent=1 // pred_region
      _
    $region9: #{tpu_custom_call.1} parent=1 // pred_fallthru
      _
    // Predicated region
    $region10: #{tpu_custom_call.1} parent=1 // pred_check
      _
    $region11: #{tpu_custom_call.1} parent=1 // pred_check_branch
      %19 = sbr.rel (0) target = $region13
    $region12: #{tpu_custom_call.1} parent=1 // pred_region
      _
    $region13: #{tpu_custom_call.1} parent=1 // pred_fallthru
      _
    // Predicated region
    $region14: #{tpu_custom_call.1} parent=1 // pred_check
      _
    $region15: #{tpu_custom_call.1} parent=1 // pred_check_branch
      %21 = sbr.rel (0) target = $region17
    $region16: #{tpu_custom_call.1} parent=1 // pred_region
      _
    $region17: #{tpu_custom_call.1} parent=1 // pred_fallthru
      _
    // Predicated region
    $region18: #{tpu_custom_call.1} parent=1 // pred_check
      _
    $region19: #{tpu_custom_call.1} parent=1 // pred_check_branch
      %23 = sbr.rel (0) target = $region21
    $region20: #{tpu_custom_call.1} parent=1 // pred_region
      _
    $region21: #{tpu_custom_call.1} parent=1 // pred_fallthru
      _
    // Predicated region
    $region22: #{tpu_custom_call.1} parent=1 // pred_check
      _
    $region23: #{tpu_custom_call.1} parent=1 // pred_check_branch
      %25 = sbr.rel (0) target = $region25
    $region24: #{tpu_custom_call.1} parent=1 // pred_region
      _
    $region25: #{tpu_custom_call.1} parent=1 // pred_fallthru
      _
    // Predicated region
    $region26: #{tpu_custom_call.1} parent=1 // pred_check
      _
    $region27: #{tpu_custom_call.1} parent=1 // pred_check_branch
      %27 = sbr.rel (0) target = $region29
    $region28: #{tpu_custom_call.1} parent=1 // pred_region
      _
    $region29: #{tpu_custom_call.1} parent=1 // pred_fallthru
      _
    // Predicated region
    $region30: #{tpu_custom_call.1} parent=1 // pred_check
      _
    $region31: #{tpu_custom_call.1} parent=1 // pred_check_branch
      %29 = sbr.rel (0) target = $region33
    $region32: #{tpu_custom_call.1} parent=1 // pred_region
      _
    $region33: #{tpu_custom_call.1} parent=1 // pred_fallthru
      _
    %p30 = scmp.eq.s32.totalorder 0, 0
    // Predicated region
    $region34: #{tpu_custom_call.1} parent=1 // pred_check
      %p31 = pneg %p30
    $region35: #{tpu_custom_call.1} parent=1 // pred_check_branch
      %33 = sbr.rel (%p31) target = $region37
    $region36: #{tpu_custom_call.1} parent=1 // pred_region
      %v34 = vld [vmem:[%s0] sm:$0x3]
      %v35 = vld [vmem:[%s5] sm:$0x3]
      %37 = vset.pattern.permute.xlu0 0
      %38 = vperm.xlu0 %37, %v35
      %v39 = vpop.permute.xlu0 %38
      %v41 = vmul.f32 %v34, %v39
      %v42 = vld [vmem:[%s4] sm:$0x3]
      %44 = vset.pattern.permute.xlu0 0
      %45 = vperm.xlu0 %44, %v42
      %v46 = vpop.permute.xlu0 %45
      %v48 = vadd.f32 %v41, %v46
      %v49 = vmul.f32 %v48, 0.017453292
      %v50 = vand.u32 2147483647, %v49
      %vm51 = vcmp.le.f32.partialorder %v50, 0.7853982
      %vm52 = vcmp.lt.s32.totalorder %v49, 0
      %v53 = vand.u32 %v49, 2139095040
      %v54 = vshrl.u32 %v53, 23
      %v55 = vsub.s32 %v54, 127
      %v56 = vand.u32 2147483647, %v49
      %v57 = vand.u32 %v56, 8388607
      %v58 = vor.u32 %v57, 8388608
      %v59 = vsub.s32 0, %v58
      %v60 = vadd.s32 %v55, 1
      %vm61 = vcmp.gt.s32.totalorder %v60, 0
      %v62 = vsel %vm61, %v60, 0
      %v63 = vshrl.u32 %v62, 5
      %v64 = vand.u32 %v62, 31
      %v65 = vsub.s32 32, %v64
      %v66 = vshrl.u32 683565275, %v65
      %v67 = vshll.u32 683565275, %v64
      %v68 = vshrl.u32 2475754826, %v65
      %v69 = vor.u32 %v67, %v68
      %v70 = vshll.u32 2475754826, %v64
      %v71 = vshrl.u32 2131351028, %v65
      %v72 = vor.u32 %v70, %v71
      %v73 = vshll.u32 2131351028, %v64
      %v74 = vshrl.u32 2102212464, %v65
      %v75 = vor.u32 %v73, %v74
      %v76 = vshll.u32 2102212464, %v64
      %v77 = vshrl.u32 920167782, %v65
      %v78 = vor.u32 %v76, %v77
      %v79 = vshll.u32 920167782, %v64
      %v80 = vshrl.u32 1326507024, %v65
      %v81 = vor.u32 %v79, %v80
      %vm82 = vcmp.lt.s32.totalorder %v63, 1
      %vm83 = vcmp.lt.s32.totalorder %v63, 2
      %vm84 = vcmp.lt.s32.totalorder %v63, 3
      %vm85 = vcmp.lt.s32.totalorder %v63, 4
      %v86 = vsel %vm82, %v66, %v69
      %v87 = vsel %vm85, %v75, 2102212464
      %v88 = vsel %vm84, %v72, %v87
      %v89 = vsel %vm83, %v86, %v88
      %v90 = vsel %vm82, %v69, %v72
      %v91 = vsel %vm85, %v78, 920167782
      %v92 = vsel %vm84, %v75, %v91
      %v93 = vsel %vm83, %v90, %v92
      %v94 = vsel %vm82, %v72, %v75
      %v95 = vsel %vm85, %v81, 1326507024
      %v96 = vsel %vm84, %v78, %v95
      %v97 = vsel %vm83, %v94, %v96
      %v98 = vshll.u32 %v58, 8
      %v99 = vmul.u32.u64.compose %v98, %v97
      %v100 = vextract.low.u32 %v99
      %v101 = vextract.high.u32 %v99
      %v102 = vmul.u32.u64.compose %v98, %v93
      %v103 = vextract.low.u32 %v102
      %v104 = vextract.high.u32 %v102
      %v105 = vmul.u32 %v98, %v89
      %v106 = vadd.s32 %v101, %v103
      %vm107 = vc.u32 %v101, %v103
      %v108 = vadd.s32 %v104, 1
      %v109 = vsel %vm107, %v108, %v104
      %v110 = vadd.s32 %v105, %v109
      %v111 = vadd.s32 %v110, 536870912
      %v112 = vshrl.u32 %v111, 30
      %v113 = vshll.u32 %v112, 30
      %v114 = vsub.s32 %v110, %v113
      %vm115 = vcmp.lt.s32.totalorder %v114, 0
      %v116 = vsub.s32 0, %v114
      %v117 = vsel %vm115, %v116, %v114
      %v118 = vclz %v117
      %v119 = vsub.s32 %v118, 2
      %vm120 = vcmp.gt.s32.totalorder 0, %v119
      %v121 = vsel %vm120, 0, %v119
      %v122 = vsub.s32 32, %v121
      %v123 = vshll.u32 %v114, %v121
      %v124 = vshrl.u32 %v106, %v122
      %v125 = vor.u32 %v123, %v124
      %v126 = vsub.s32 4294967266, %v121
      %v127 = vadd.s32 %v126, 127
      %v128 = vshll.u32 %v127, 23
      %v129 = vor.u32 4788187, %v128
      %v130 = vand.u32 2147483647, %v129
      %v132 = vcvt.s32.f32 %v125
      %v133 = vmul.f32 %v132, %v130
      %v134 = vxor.u32 %v133, 2147483648
      %v135 = vsel %vm52, %v134, %v133
      %v136 = vsub.s32 4, %v112
      %v137 = vsel %vm52, %v136, %v112
      %v138 = vsel %vm51, %v49, %v135
      %v139 = vsel %vm51, 0, %v137
      %v140 = vcosq.f32.pop %v138
      %v141 = vsinq.f32.pop %v138
      %vm142 = vweird.f32 %v49
      %v143 = vand.u32 %v139, 3
      %vm144 = vcmp.lt.s32.totalorder %v143, 2
      %vm145 = vcmp.eq.s32.totalorder %v143, 0
      %v146 = vxor.u32 %v141, 2147483648
      %v147 = vsel %vm145, %v140, %v146
      %vm148 = vcmp.eq.s32.totalorder %v143, 2
      %v149 = vxor.u32 %v140, 2147483648
      %v150 = vsel %vm148, %v149, %v141
      %v151 = vsel %vm144, %v147, %v150
      %v152 = vsel %vm142, nan, %v151
      %v154 = vrot.slane %v152, 1
      %v156 = vmul.f32 %v48, %v154
      %157 = vst [vmem:[#allocation2] sm:$0x1] %v156
      %v158 = vand.u32 2147483647, %v49
      %vm159 = vcmp.le.f32.partialorder %v158, 0.7853982
      %vm160 = vcmp.lt.s32.totalorder %v49, 0
      %v161 = vand.u32 %v49, 2139095040
      %v162 = vshrl.u32 %v161, 23
      %v163 = vsub.s32 %v162, 127
      %v164 = vand.u32 2147483647, %v49
      %v165 = vand.u32 %v164, 8388607
      %v166 = vor.u32 %v165, 8388608
      %v167 = vsub.s32 0, %v166
      %v168 = vadd.s32 %v163, 1
      %vm169 = vcmp.gt.s32.totalorder %v168, 0
      %v170 = vsel %vm169, %v168, 0
      %v171 = vshrl.u32 %v170, 5
      %v172 = vand.u32 %v170, 31
      %v173 = vsub.s32 32, %v172
      %v174 = vshrl.u32 683565275, %v173
      %v175 = vshll.u32 683565275, %v172
      %v176 = vshrl.u32 2475754826, %v173
      %v177 = vor.u32 %v175, %v176
      %v178 = vshll.u32 2475754826, %v172
      %v179 = vshrl.u32 2131351028, %v173
      %v180 = vor.u32 %v178, %v179
      %v181 = vshll.u32 2131351028, %v172
      %v182 = vshrl.u32 2102212464, %v173
      %v183 = vor.u32 %v181, %v182
      %v184 = vshll.u32 2102212464, %v172
      %v185 = vshrl.u32 920167782, %v173
      %v186 = vor.u32 %v184, %v185
      %v187 = vshll.u32 920167782, %v172
      %v188 = vshrl.u32 1326507024, %v173
      %v189 = vor.u32 %v187, %v188
      %vm190 = vcmp.lt.s32.totalorder %v171, 1
      %vm191 = vcmp.lt.s32.totalorder %v171, 2
      %vm192 = vcmp.lt.s32.totalorder %v171, 3
      %vm193 = vcmp.lt.s32.totalorder %v171, 4
      %v194 = vsel %vm190, %v174, %v177
      %v195 = vsel %vm193, %v183, 2102212464
      %v196 = vsel %vm192, %v180, %v195
      %v197 = vsel %vm191, %v194, %v196
      %v198 = vsel %vm190, %v177, %v180
      %v199 = vsel %vm193, %v186, 920167782
      %v200 = vsel %vm192, %v183, %v199
      %v201 = vsel %vm191, %v198, %v200
      %v202 = vsel %vm190, %v180, %v183
      %v203 = vsel %vm193, %v189, 1326507024
      %v204 = vsel %vm192, %v186, %v203
      %v205 = vsel %vm191, %v202, %v204
      %v206 = vshll.u32 %v166, 8
      %v207 = vmul.u32.u64.compose %v206, %v205
      %v208 = vextract.low.u32 %v207
      %v209 = vextract.high.u32 %v207
      %v210 = vmul.u32.u64.compose %v206, %v201
      %v211 = vextract.low.u32 %v210
      %v212 = vextract.high.u32 %v210
      %v213 = vmul.u32 %v206, %v197
      %v214 = vadd.s32 %v209, %v211
      %vm215 = vc.u32 %v209, %v211
      %v216 = vadd.s32 %v212, 1
      %v217 = vsel %vm215, %v216, %v212
      %v218 = vadd.s32 %v213, %v217
      %v219 = vadd.s32 %v218, 536870912
      %v220 = vshrl.u32 %v219, 30
      %v221 = vshll.u32 %v220, 30
      %v222 = vsub.s32 %v218, %v221
      %vm223 = vcmp.lt.s32.totalorder %v222, 0
      %v224 = vsub.s32 0, %v222
      %v225 = vsel %vm223, %v224, %v222
      %v226 = vclz %v225
      %v227 = vsub.s32 %v226, 2
      %vm228 = vcmp.gt.s32.totalorder 0, %v227
      %v229 = vsel %vm228, 0, %v227
      %v230 = vsub.s32 32, %v229
      %v231 = vshll.u32 %v222, %v229
      %v232 = vshrl.u32 %v214, %v230
      %v233 = vor.u32 %v231, %v232
      %v234 = vsub.s32 4294967266, %v229
      %v235 = vadd.s32 %v234, 127
      %v236 = vshll.u32 %v235, 23
      %v237 = vor.u32 4788187, %v236
      %v238 = vand.u32 2147483647, %v237
      %v240 = vcvt.s32.f32 %v233
      %v241 = vmul.f32 %v240, %v238
      %v242 = vxor.u32 %v241, 2147483648
      %v243 = vsel %vm160, %v242, %v241
      %v244 = vsub.s32 4, %v220
      %v245 = vsel %vm160, %v244, %v220
      %v246 = vsel %vm159, %v49, %v243
      %v247 = vsel %vm159, 0, %v245
      %v248 = vcosq.f32.pop %v246
      %v249 = vsinq.f32.pop %v246
      %vm250 = vweird.f32 %v49
      %v251 = vadd.s32 %v247, 3
      %v252 = vand.u32 %v251, 3
      %vm253 = vcmp.lt.s32.totalorder %v252, 2
      %vm254 = vcmp.eq.s32.totalorder %v252, 0
      %v255 = vxor.u32 %v249, 2147483648
      %v256 = vsel %vm254, %v248, %v255
      %vm257 = vcmp.eq.s32.totalorder %v252, 2
      %v258 = vxor.u32 %v248, 2147483648
      %v259 = vsel %vm257, %v258, %v249
      %v260 = vsel %vm253, %v256, %v259
      %v261 = vsel %vm250, nan, %v260
      %v263 = vrot.slane %v261, 1
      %v265 = vmul.f32 %v48, %v263
      %266 = vst [vmem:[#allocation2 + $0x1] sm:$0x1] %v265
      %267 = vst [vmem:[#allocation3] sm:$0x3] 0.0
      %vm268 = vcmask 0
      %269 = vst.msk [vmem:[#allocation4] sm:$0x1] %vm268, 0.0
    $region37: #{tpu_custom_call.1} parent=1 // pred_fallthru
      _
    %v270 = vld [vmem:[%s3] sm:$0x3]
    %v271 = vld [vmem:[%s7] sm:$0x3]
    %273 = vset.pattern.permute.xlu0 0
    %274 = vperm.xlu0 %273, %v271
    %v275 = vpop.permute.xlu0 %274
    %v277 = vmul.f32 %v270, %v275
    %v278 = vld [vmem:[%s6] sm:$0x3]
    %280 = vset.pattern.permute.xlu0 0
    %281 = vperm.xlu0 %280, %v278
    %v282 = vpop.permute.xlu0 %281
    %v284 = vadd.f32 %v277, %v282
    %v285 = vmul.f32 %v284, %v284
    %v287 = vrot.slane %v285, 1
    %v289 = vadd.f32 %v285, %v287
    %v290 = vrcp.pop %v289
    %v291 = vmul.f32 %v284, %v290
    %v292 = vsub.f32 0.0, %v284
    %v294 = vrot.slane %v289, 7
    %v296 = vrcp.pop %v294
    %v297 = vmul.f32 %v292, %v296
    %v298 = vld [vmem:[%s2] sm:$0x1]
    %v299 = vld [vmem:[%s2 + $0x1] sm:$0x1]
    %v300 = vlaneseq
    %v301 = vshrl.u32 %v300, 7
    %v302 = vadd.s32 %v301, 8
    %v303 = vadd.s32 %v301, 16
    %v304 = vadd.s32 %v301, 24
    %v305 = vadd.s32 %v301, 32
    %v306 = vadd.s32 %v301, 40
    %v307 = vadd.s32 %v301, 48
    %v308 = vadd.s32 %v301, 56
    %v309 = vadd.s32 %v301, 64
    %v310 = vadd.s32 %v301, 72
    %v311 = vadd.s32 %v301, 80
    %v312 = vadd.s32 %v301, 88
    %v313 = vadd.s32 %v301, 96
    %v314 = vadd.s32 %v301, 104
    %v315 = vadd.s32 %v301, 112
    %v316 = vadd.s32 %v301, 120
    %v317 = vlaneseq
    %v318 = vshrl.u32 %v317, 7
    %v319 = vsub.s32 0, %v318
    %v320 = vrot.slane %v298, %v319
    %vm321 = vcmp.eq.s32.totalorder %v301, %v320
    %vm322 = vcmp.eq.s32.totalorder %v302, %v320
    %vm323 = vcmp.eq.s32.totalorder %v303, %v320
    %vm324 = vcmp.eq.s32.totalorder %v304, %v320
    %vm325 = vcmp.eq.s32.totalorder %v305, %v320
    %vm326 = vcmp.eq.s32.totalorder %v306, %v320
    %vm327 = vcmp.eq.s32.totalorder %v307, %v320
    %vm328 = vcmp.eq.s32.totalorder %v308, %v320
    %vm329 = vcmp.eq.s32.totalorder %v309, %v320
    %vm330 = vcmp.eq.s32.totalorder %v310, %v320
    %vm331 = vcmp.eq.s32.totalorder %v311, %v320
    %vm332 = vcmp.eq.s32.totalorder %v312, %v320
    %vm333 = vcmp.eq.s32.totalorder %v313, %v320
    %vm334 = vcmp.eq.s32.totalorder %v314, %v320
    %vm335 = vcmp.eq.s32.totalorder %v315, %v320
    %vm336 = vcmp.eq.s32.totalorder %v316, %v320
    %v337 = vsel %vm321, 1, 0
    %v338 = vsel %vm322, 1, 0
    %v339 = vsel %vm323, 1, 0
    %v340 = vsel %vm324, 1, 0
    %v341 = vsel %vm325, 1, 0
    %v342 = vsel %vm326, 1, 0
    %v343 = vsel %vm327, 1, 0
    %v344 = vsel %vm328, 1, 0
    %v345 = vsel %vm329, 1, 0
    %v346 = vsel %vm330, 1, 0
    %v347 = vsel %vm331, 1, 0
    %v348 = vsel %vm332, 1, 0
    %v349 = vsel %vm333, 1, 0
    %v350 = vsel %vm334, 1, 0
    %v351 = vsel %vm335, 1, 0
    %v352 = vsel %vm336, 1, 0
    %v353 = vcvt.s32.f32 %v337
    %v354 = vcvt.s32.f32 %v338
    %v355 = vcvt.s32.f32 %v339
    %v356 = vcvt.s32.f32 %v340
    %v357 = vcvt.s32.f32 %v341
    %v358 = vcvt.s32.f32 %v342
    %v359 = vcvt.s32.f32 %v343
    %v360 = vcvt.s32.f32 %v344
    %v361 = vcvt.s32.f32 %v345
    %v362 = vcvt.s32.f32 %v346
    %v363 = vcvt.s32.f32 %v347
    %v364 = vcvt.s32.f32 %v348
    %v365 = vcvt.s32.f32 %v349
    %v366 = vcvt.s32.f32 %v350
    %v367 = vcvt.s32.f32 %v351
    %v368 = vcvt.s32.f32 %v352
    %v369 = vlaneseq
    %v370 = vshrl.u32 %v369, 7
    %v371 = vsub.s32 0, %v370
    %v372 = vrot.slane %v299, %v371
    %vm373 = vcmp.eq.s32.totalorder %v301, %v372
    %vm374 = vcmp.eq.s32.totalorder %v302, %v372
    %vm375 = vcmp.eq.s32.totalorder %v303, %v372
    %vm376 = vcmp.eq.s32.totalorder %v304, %v372
    %vm377 = vcmp.eq.s32.totalorder %v305, %v372
    %vm378 = vcmp.eq.s32.totalorder %v306, %v372
    %vm379 = vcmp.eq.s32.totalorder %v307, %v372
    %vm380 = vcmp.eq.s32.totalorder %v308, %v372
    %vm381 = vcmp.eq.s32.totalorder %v309, %v372
    %vm382 = vcmp.eq.s32.totalorder %v310, %v372
    %vm383 = vcmp.eq.s32.totalorder %v311, %v372
    %vm384 = vcmp.eq.s32.totalorder %v312, %v372
    %vm385 = vcmp.eq.s32.totalorder %v313, %v372
    %vm386 = vcmp.eq.s32.totalorder %v314, %v372
    %vm387 = vcmp.eq.s32.totalorder %v315, %v372
    %vm388 = vcmp.eq.s32.totalorder %v316, %v372
    %v389 = vsel %vm373, 1, 0
    %v390 = vsel %vm374, 1, 0
    %v391 = vsel %vm375, 1, 0
    %v392 = vsel %vm376, 1, 0
    %v393 = vsel %vm377, 1, 0
    %v394 = vsel %vm378, 1, 0
    %v395 = vsel %vm379, 1, 0
    %v396 = vsel %vm380, 1, 0
    %v397 = vsel %vm381, 1, 0
    %v398 = vsel %vm382, 1, 0
    %v399 = vsel %vm383, 1, 0
    %v400 = vsel %vm384, 1, 0
    %v401 = vsel %vm385, 1, 0
    %v402 = vsel %vm386, 1, 0
    %v403 = vsel %vm387, 1, 0
    %v404 = vsel %vm388, 1, 0
    %v405 = vcvt.s32.f32 %v389
    %v406 = vcvt.s32.f32 %v390
    %v407 = vcvt.s32.f32 %v391
    %v408 = vcvt.s32.f32 %v392
    %v409 = vcvt.s32.f32 %v393
    %v410 = vcvt.s32.f32 %v394
    %v411 = vcvt.s32.f32 %v395
    %v412 = vcvt.s32.f32 %v396
    %v413 = vcvt.s32.f32 %v397
    %v414 = vcvt.s32.f32 %v398
    %v415 = vcvt.s32.f32 %v399
    %v416 = vcvt.s32.f32 %v400
    %v417 = vcvt.s32.f32 %v401
    %v418 = vcvt.s32.f32 %v402
    %v419 = vcvt.s32.f32 %v403
    %v420 = vcvt.s32.f32 %v404
    %v421 = vld [vmem:[#allocation2] sm:$0x3]
    %422 = vmatprep.subr.mxu0 0.0
    %v423 = vand.u32 %v353, 4294901760
    %424 = vmatpush1.msra.mxu0 %v423
    %425 = vmatprep.subr.mxu0 0.0
    %v426 = vand.u32 %v354, 4294901760
    %427 = vmatpush1.msra.mxu0 %v426
    %428 = vmatprep.subr.mxu0 0.0
    %v429 = vand.u32 %v355, 4294901760
    %430 = vmatpush1.msra.mxu0 %v429
    %431 = vmatprep.subr.mxu0 0.0
    %v432 = vand.u32 %v356, 4294901760
    %433 = vmatpush1.msra.mxu0 %v432
    %434 = vmatprep.subr.mxu0 0.0
    %v435 = vand.u32 %v357, 4294901760
    %436 = vmatpush1.msra.mxu0 %v435
    %437 = vmatprep.subr.mxu0 0.0
    %v438 = vand.u32 %v358, 4294901760
    %439 = vmatpush1.msra.mxu0 %v438
    %440 = vmatprep.subr.mxu0 0.0
    %v441 = vand.u32 %v359, 4294901760
    %442 = vmatpush1.msra.mxu0 %v441
    %443 = vmatprep.subr.mxu0 0.0
    %v444 = vand.u32 %v360, 4294901760
    %445 = vmatpush1.msra.mxu0 %v444
    %446 = vmatprep.subr.mxu0 0.0
    %v447 = vand.u32 %v361, 4294901760
    %448 = vmatpush1.msra.mxu0 %v447
    %449 = vmatprep.subr.mxu0 0.0
    %v450 = vand.u32 %v362, 4294901760
    %451 = vmatpush1.msra.mxu0 %v450
    %452 = vmatprep.subr.mxu0 0.0
    %v453 = vand.u32 %v363, 4294901760
    %454 = vmatpush1.msra.mxu0 %v453
    %455 = vmatprep.subr.mxu0 0.0
    %v456 = vand.u32 %v364, 4294901760
    %457 = vmatpush1.msra.mxu0 %v456
    %458 = vmatprep.subr.mxu0 0.0
    %v459 = vand.u32 %v365, 4294901760
    %460 = vmatpush1.msra.mxu0 %v459
    %461 = vmatprep.subr.mxu0 0.0
    %v462 = vand.u32 %v366, 4294901760
    %463 = vmatpush1.msra.mxu0 %v462
    %464 = vmatprep.subr.mxu0 0.0
    %v465 = vand.u32 %v367, 4294901760
    %466 = vmatpush1.msra.mxu0 %v465
    %467 = vmatprep.subr.mxu0 0.0
    %v468 = vand.u32 %v368, 4294901760
    %469 = vmatpush1.msra.mxu0 %v468
    %470 = vmatprep.subr.mxu0 0.0
    %471 = vmatpush1.msra.mxu0 0.0
    %472 = vmatprep.subr.mxu0 0.0
    %473 = vmatpush1.msra.mxu0 0.0
    %474 = vmatprep.subr.mxu0 0.0
    %475 = vmatpush1.msra.mxu0 0.0
    %476 = vmatprep.subr.mxu0 0.0
    %477 = vmatpush1.msra.mxu0 0.0
    %478 = vmatprep.subr.mxu0 0.0
    %479 = vmatpush1.msra.mxu0 0.0
    %480 = vmatprep.subr.mxu0 0.0
    %481 = vmatpush1.msra.mxu0 0.0
    %482 = vmatprep.subr.mxu0 0.0
    %483 = vmatpush1.msra.mxu0 0.0
    %484 = vmatprep.subr.mxu0 0.0
    %485 = vmatpush1.msra.mxu0 0.0
    %486 = vmatprep.subr.mxu0 0.0
    %487 = vmatpush1.msra.mxu0 0.0
    %488 = vmatprep.subr.mxu0 0.0
    %489 = vmatpush1.msra.mxu0 0.0
    %490 = vmatprep.subr.mxu0 0.0
    %491 = vmatpush1.msra.mxu0 0.0
    %492 = vmatprep.subr.mxu0 0.0
    %493 = vmatpush1.msra.mxu0 0.0
    %494 = vmatprep.subr.mxu0 0.0
    %495 = vmatpush1.msra.mxu0 0.0
    %496 = vmatprep.subr.mxu0 0.0
    %497 = vmatpush1.msra.mxu0 0.0
    %498 = vmatprep.subr.mxu0 0.0
    %499 = vmatpush1.msra.mxu0 0.0
    %500 = vmatprep.subr.mxu0 0.0
    %501 = vmatpush1.msra.mxu0 0.0
    %502 = vmatprep.mubr.f32.mxu0 0.0
    %v503 = vand.u32 %v421, 4294901760
    %v504 = vsub.f32 %v421, %v503
    %v505 = vand.u32 %v504, 4294901760
    %v506 = vsub.f32 %v504, %v505
    %v507 = vand.u32 %v506, 4294901760
    %508 = vmatmul.mubr.f32.gmra.mrb[0].mxu0 %v507
    %v509 = vpop.f32.mrb[0].mxu0
    %v510 = vadd.f32 0.0, %v509
    %v511 = vpop.f32.mrb[0].mxu0
    %512 = vdwg.mxu0
    %513 = vmatprep.subr.mxu0 0.0
    %v514 = vand.u32 %v353, 4294901760
    %v515 = vsub.f32 %v353, %v514
    %v516 = vand.u32 %v515, 4294901760
    %v517 = vsub.f32 %v515, %v516
    %v518 = vand.u32 %v517, 4294901760
    %519 = vmatpush1.msra.mxu0 %v518
    %520 = vmatprep.subr.mxu0 0.0
    %v521 = vand.u32 %v354, 4294901760
    %v522 = vsub.f32 %v354, %v521
    %v523 = vand.u32 %v522, 4294901760
    %v524 = vsub.f32 %v522, %v523
    %v525 = vand.u32 %v524, 4294901760
    %526 = vmatpush1.msra.mxu0 %v525
    %527 = vmatprep.subr.mxu0 0.0
    %v528 = vand.u32 %v355, 4294901760
    %v529 = vsub.f32 %v355, %v528
    %v530 = vand.u32 %v529, 4294901760
    %v531 = vsub.f32 %v529, %v530
    %v532 = vand.u32 %v531, 4294901760
    %533 = vmatpush1.msra.mxu0 %v532
    %534 = vmatprep.subr.mxu0 0.0
    %v535 = vand.u32 %v356, 4294901760
    %v536 = vsub.f32 %v356, %v535
    %v537 = vand.u32 %v536, 4294901760
    %v538 = vsub.f32 %v536, %v537
    %v539 = vand.u32 %v538, 4294901760
    %540 = vmatpush1.msra.mxu0 %v539
    %541 = vmatprep.subr.mxu0 0.0
    %v542 = vand.u32 %v357, 4294901760
    %v543 = vsub.f32 %v357, %v542
    %v544 = vand.u32 %v543, 4294901760
    %v545 = vsub.f32 %v543, %v544
    %v546 = vand.u32 %v545, 4294901760
    %547 = vmatpush1.msra.mxu0 %v546
    %548 = vmatprep.subr.mxu0 0.0
    %v549 = vand.u32 %v358, 4294901760
    %v550 = vsub.f32 %v358, %v549
    %v551 = vand.u32 %v550, 4294901760
    %v552 = vsub.f32 %v550, %v551
    %v553 = vand.u32 %v552, 4294901760
    %554 = vmatpush1.msra.mxu0 %v553
    %555 = vmatprep.subr.mxu0 0.0
    %v556 = vand.u32 %v359, 4294901760
    %v557 = vsub.f32 %v359, %v556
    %v558 = vand.u32 %v557, 4294901760
    %v559 = vsub.f32 %v557, %v558
    %v560 = vand.u32 %v559, 4294901760
    %561 = vmatpush1.msra.mxu0 %v560
    %562 = vmatprep.subr.mxu0 0.0
    %v563 = vand.u32 %v360, 4294901760
    %v564 = vsub.f32 %v360, %v563
    %v565 = vand.u32 %v564, 4294901760
    %v566 = vsub.f32 %v564, %v565
    %v567 = vand.u32 %v566, 4294901760
    %568 = vmatpush1.msra.mxu0 %v567
    %569 = vmatprep.subr.mxu0 0.0
    %v570 = vand.u32 %v361, 4294901760
    %v571 = vsub.f32 %v361, %v570
    %v572 = vand.u32 %v571, 4294901760
    %v573 = vsub.f32 %v571, %v572
    %v574 = vand.u32 %v573, 4294901760
    %575 = vmatpush1.msra.mxu0 %v574
    %576 = vmatprep.subr.mxu0 0.0
    %v577 = vand.u32 %v362, 4294901760
    %v578 = vsub.f32 %v362, %v577
    %v579 = vand.u32 %v578, 4294901760
    %v580 = vsub.f32 %v578, %v579
    %v581 = vand.u32 %v580, 4294901760
    %582 = vmatpush1.msra.mxu0 %v581
    %583 = vmatprep.subr.mxu0 0.0
    %v584 = vand.u32 %v363, 4294901760
    %v585 = vsub.f32 %v363, %v584
    %v586 = vand.u32 %v585, 4294901760
    %v587 = vsub.f32 %v585, %v586
    %v588 = vand.u32 %v587, 4294901760
    %589 = vmatpush1.msra.mxu0 %v588
    %590 = vmatprep.subr.mxu0 0.0
    %v591 = vand.u32 %v364, 4294901760
    %v592 = vsub.f32 %v364, %v591
    %v593 = vand.u32 %v592, 4294901760
    %v594 = vsub.f32 %v592, %v593
    %v595 = vand.u32 %v594, 4294901760
    %596 = vmatpush1.msra.mxu0 %v595
    %597 = vmatprep.subr.mxu0 0.0
    %v598 = vand.u32 %v365, 4294901760
    %v599 = vsub.f32 %v365, %v598
    %v600 = vand.u32 %v599, 4294901760
    %v601 = vsub.f32 %v599, %v600
    %v602 = vand.u32 %v601, 4294901760
    %603 = vmatpush1.msra.mxu0 %v602
    %604 = vmatprep.subr.mxu0 0.0
    %v605 = vand.u32 %v366, 4294901760
    %v606 = vsub.f32 %v366, %v605
    %v607 = vand.u32 %v606, 4294901760
    %v608 = vsub.f32 %v606, %v607
    %v609 = vand.u32 %v608, 4294901760
    %610 = vmatpush1.msra.mxu0 %v609
    %611 = vmatprep.subr.mxu0 0.0
    %v612 = vand.u32 %v367, 4294901760
    %v613 = vsub.f32 %v367, %v612
    %v614 = vand.u32 %v613, 4294901760
    %v615 = vsub.f32 %v613, %v614
    %v616 = vand.u32 %v615, 4294901760
    %617 = vmatpush1.msra.mxu0 %v616
    %618 = vmatprep.subr.mxu0 0.0
    %v619 = vand.u32 %v368, 4294901760
    %v620 = vsub.f32 %v368, %v619
    %v621 = vand.u32 %v620, 4294901760
    %v622 = vsub.f32 %v620, %v621
    %v623 = vand.u32 %v622, 4294901760
    %624 = vmatpush1.msra.mxu0 %v623
    %625 = vmatprep.subr.mxu0 0.0
    %626 = vmatpush1.msra.mxu0 0.0
    %627 = vmatprep.subr.mxu0 0.0
    %628 = vmatpush1.msra.mxu0 0.0
    %629 = vmatprep.subr.mxu0 0.0
    %630 = vmatpush1.msra.mxu0 0.0
    %631 = vmatprep.subr.mxu0 0.0
    %632 = vmatpush1.msra.mxu0 0.0
    %633 = vmatprep.subr.mxu0 0.0
    %634 = vmatpush1.msra.mxu0 0.0
    %635 = vmatprep.subr.mxu0 0.0
    %636 = vmatpush1.msra.mxu0 0.0
    %637 = vmatprep.subr.mxu0 0.0
    %638 = vmatpush1.msra.mxu0 0.0
    %639 = vmatprep.subr.mxu0 0.0
    %640 = vmatpush1.msra.mxu0 0.0
    %641 = vmatprep.subr.mxu0 0.0
    %642 = vmatpush1.msra.mxu0 0.0
    %643 = vmatprep.subr.mxu0 0.0
    %644 = vmatpush1.msra.mxu0 0.0
    %645 = vmatprep.subr.mxu0 0.0
    %646 = vmatpush1.msra.mxu0 0.0
    %647 = vmatprep.subr.mxu0 0.0
    %648 = vmatpush1.msra.mxu0 0.0
    %649 = vmatprep.subr.mxu0 0.0
    %650 = vmatpush1.msra.mxu0 0.0
    %651 = vmatprep.subr.mxu0 0.0
    %652 = vmatpush1.msra.mxu0 0.0
    %653 = vmatprep.subr.mxu0 0.0
    %654 = vmatpush1.msra.mxu0 0.0
    %655 = vmatprep.subr.mxu0 0.0
    %656 = vmatpush1.msra.mxu0 0.0
    %657 = vmatprep.mubr.f32.mxu0 0.0
    %v658 = vand.u32 %v421, 4294901760
    %659 = vmatmul.mubr.f32.gmra.mrb[0].mxu0 %v658
    %v660 = vpop.f32.mrb[0].mxu0
    %v661 = vadd.f32 %v510, %v660
    %v662 = vpop.f32.mrb[0].mxu0
    %663 = vdwg.mxu0
    %664 = vmatprep.subr.mxu0 0.0
    %v665 = vand.u32 %v353, 4294901760
    %v666 = vsub.f32 %v353, %v665
    %667 = vmatpush1.msra.mxu0 %v666
    %668 = vmatprep.subr.mxu0 0.0
    %v669 = vand.u32 %v354, 4294901760
    %v670 = vsub.f32 %v354, %v669
    %671 = vmatpush1.msra.mxu0 %v670
    %672 = vmatprep.subr.mxu0 0.0
    %v673 = vand.u32 %v355, 4294901760
    %v674 = vsub.f32 %v355, %v673
    %675 = vmatpush1.msra.mxu0 %v674
    %676 = vmatprep.subr.mxu0 0.0
    %v677 = vand.u32 %v356, 4294901760
    %v678 = vsub.f32 %v356, %v677
    %679 = vmatpush1.msra.mxu0 %v678
    %680 = vmatprep.subr.mxu0 0.0
    %v681 = vand.u32 %v357, 4294901760
    %v682 = vsub.f32 %v357, %v681
    %683 = vmatpush1.msra.mxu0 %v682
    %684 = vmatprep.subr.mxu0 0.0
    %v685 = vand.u32 %v358, 4294901760
    %v686 = vsub.f32 %v358, %v685
    %687 = vmatpush1.msra.mxu0 %v686
    %688 = vmatprep.subr.mxu0 0.0
    %v689 = vand.u32 %v359, 4294901760
    %v690 = vsub.f32 %v359, %v689
    %691 = vmatpush1.msra.mxu0 %v690
    %692 = vmatprep.subr.mxu0 0.0
    %v693 = vand.u32 %v360, 4294901760
    %v694 = vsub.f32 %v360, %v693
    %695 = vmatpush1.msra.mxu0 %v694
    %696 = vmatprep.subr.mxu0 0.0
    %v697 = vand.u32 %v361, 4294901760
    %v698 = vsub.f32 %v361, %v697
    %699 = vmatpush1.msra.mxu0 %v698
    %700 = vmatprep.subr.mxu0 0.0
    %v701 = vand.u32 %v362, 4294901760
    %v702 = vsub.f32 %v362, %v701
    %703 = vmatpush1.msra.mxu0 %v702
    %704 = vmatprep.subr.mxu0 0.0
    %v705 = vand.u32 %v363, 4294901760
    %v706 = vsub.f32 %v363, %v705
    %707 = vmatpush1.msra.mxu0 %v706
    %708 = vmatprep.subr.mxu0 0.0
    %v709 = vand.u32 %v364, 4294901760
    %v710 = vsub.f32 %v364, %v709
    %711 = vmatpush1.msra.mxu0 %v710
    %712 = vmatprep.subr.mxu0 0.0
    %v713 = vand.u32 %v365, 4294901760
    %v714 = vsub.f32 %v365, %v713
    %715 = vmatpush1.msra.mxu0 %v714
    %716 = vmatprep.subr.mxu0 0.0
    %v717 = vand.u32 %v366, 4294901760
    %v718 = vsub.f32 %v366, %v717
    %719 = vmatpush1.msra.mxu0 %v718
    %720 = vmatprep.subr.mxu0 0.0
    %v721 = vand.u32 %v367, 4294901760
    %v722 = vsub.f32 %v367, %v721
    %723 = vmatpush1.msra.mxu0 %v722
    %724 = vmatprep.subr.mxu0 0.0
    %v725 = vand.u32 %v368, 4294901760
    %v726 = vsub.f32 %v368, %v725
    %727 = vmatpush1.msra.mxu0 %v726
    %728 = vmatprep.subr.mxu0 0.0
    %729 = vmatpush1.msra.mxu0 0.0
    %730 = vmatprep.subr.mxu0 0.0
    %731 = vmatpush1.msra.mxu0 0.0
    %732 = vmatprep.subr.mxu0 0.0
    %733 = vmatpush1.msra.mxu0 0.0
    %734 = vmatprep.subr.mxu0 0.0
    %735 = vmatpush1.msra.mxu0 0.0
    %736 = vmatprep.subr.mxu0 0.0
    %737 = vmatpush1.msra.mxu0 0.0
    %738 = vmatprep.subr.mxu0 0.0
    %739 = vmatpush1.msra.mxu0 0.0
    %740 = vmatprep.subr.mxu0 0.0
    %741 = vmatpush1.msra.mxu0 0.0
    %742 = vmatprep.subr.mxu0 0.0
    %743 = vmatpush1.msra.mxu0 0.0
    %744 = vmatprep.subr.mxu0 0.0
    %745 = vmatpush1.msra.mxu0 0.0
    %746 = vmatprep.subr.mxu0 0.0
    %747 = vmatpush1.msra.mxu0 0.0
    %748 = vmatprep.subr.mxu0 0.0
    %749 = vmatpush1.msra.mxu0 0.0
    %750 = vmatprep.subr.mxu0 0.0
    %751 = vmatpush1.msra.mxu0 0.0
    %752 = vmatprep.subr.mxu0 0.0
    %753 = vmatpush1.msra.mxu0 0.0
    %754 = vmatprep.subr.mxu0 0.0
    %755 = vmatpush1.msra.mxu0 0.0
    %756 = vmatprep.subr.mxu0 0.0
    %757 = vmatpush1.msra.mxu0 0.0
    %758 = vmatprep.subr.mxu0 0.0
    %759 = vmatpush1.msra.mxu0 0.0
    %760 = vmatprep.mubr.f32.mxu0 0.0
    %v761 = vand.u32 %v421, 4294901760
    %v762 = vsub.f32 %v421, %v761
    %763 = vmatmul.mubr.f32.gmra.mrb[0].mxu0 %v762
    %v764 = vpop.f32.mrb[0].mxu0
    %v765 = vadd.f32 %v661, %v764
    %v766 = vpop.f32.mrb[0].mxu0
    %767 = vdwg.mxu0
    %768 = vmatprep.subr.mxu0 0.0
    %v769 = vand.u32 %v353, 4294901760
    %770 = vmatpush1.msra.mxu0 %v769
    %771 = vmatprep.subr.mxu0 0.0
    %v772 = vand.u32 %v354, 4294901760
    %773 = vmatpush1.msra.mxu0 %v772
    %774 = vmatprep.subr.mxu0 0.0
    %v775 = vand.u32 %v355, 4294901760
    %776 = vmatpush1.msra.mxu0 %v775
    %777 = vmatprep.subr.mxu0 0.0
    %v778 = vand.u32 %v356, 4294901760
    %779 = vmatpush1.msra.mxu0 %v778
    %780 = vmatprep.subr.mxu0 0.0
    %v781 = vand.u32 %v357, 4294901760
    %782 = vmatpush1.msra.mxu0 %v781
    %783 = vmatprep.subr.mxu0 0.0
    %v784 = vand.u32 %v358, 4294901760
    %785 = vmatpush1.msra.mxu0 %v784
    %786 = vmatprep.subr.mxu0 0.0
    %v787 = vand.u32 %v359, 4294901760
    %788 = vmatpush1.msra.mxu0 %v787
    %789 = vmatprep.subr.mxu0 0.0
    %v790 = vand.u32 %v360, 4294901760
    %791 = vmatpush1.msra.mxu0 %v790
    %792 = vmatprep.subr.mxu0 0.0
    %v793 = vand.u32 %v361, 4294901760
    %794 = vmatpush1.msra.mxu0 %v793
    %795 = vmatprep.subr.mxu0 0.0
    %v796 = vand.u32 %v362, 4294901760
    %797 = vmatpush1.msra.mxu0 %v796
    %798 = vmatprep.subr.mxu0 0.0
    %v799 = vand.u32 %v363, 4294901760
    %800 = vmatpush1.msra.mxu0 %v799
    %801 = vmatprep.subr.mxu0 0.0
    %v802 = vand.u32 %v364, 4294901760
    %803 = vmatpush1.msra.mxu0 %v802
    %804 = vmatprep.subr.mxu0 0.0
    %v805 = vand.u32 %v365, 4294901760
    %806 = vmatpush1.msra.mxu0 %v805
    %807 = vmatprep.subr.mxu0 0.0
    %v808 = vand.u32 %v366, 4294901760
    %809 = vmatpush1.msra.mxu0 %v808
    %810 = vmatprep.subr.mxu0 0.0
    %v811 = vand.u32 %v367, 4294901760
    %812 = vmatpush1.msra.mxu0 %v811
    %813 = vmatprep.subr.mxu0 0.0
    %v814 = vand.u32 %v368, 4294901760
    %815 = vmatpush1.msra.mxu0 %v814
    %816 = vmatprep.subr.mxu0 0.0
    %817 = vmatpush1.msra.mxu0 0.0
    %818 = vmatprep.subr.mxu0 0.0
    %819 = vmatpush1.msra.mxu0 0.0
    %820 = vmatprep.subr.mxu0 0.0
    %821 = vmatpush1.msra.mxu0 0.0
    %822 = vmatprep.subr.mxu0 0.0
    %823 = vmatpush1.msra.mxu0 0.0
    %824 = vmatprep.subr.mxu0 0.0
    %825 = vmatpush1.msra.mxu0 0.0
    %826 = vmatprep.subr.mxu0 0.0
    %827 = vmatpush1.msra.mxu0 0.0
    %828 = vmatprep.subr.mxu0 0.0
    %829 = vmatpush1.msra.mxu0 0.0
    %830 = vmatprep.subr.mxu0 0.0
    %831 = vmatpush1.msra.mxu0 0.0
    %832 = vmatprep.subr.mxu0 0.0
    %833 = vmatpush1.msra.mxu0 0.0
    %834 = vmatprep.subr.mxu0 0.0
    %835 = vmatpush1.msra.mxu0 0.0
    %836 = vmatprep.subr.mxu0 0.0
    %837 = vmatpush1.msra.mxu0 0.0
    %838 = vmatprep.subr.mxu0 0.0
    %839 = vmatpush1.msra.mxu0 0.0
    %840 = vmatprep.subr.mxu0 0.0
    %841 = vmatpush1.msra.mxu0 0.0
    %842 = vmatprep.subr.mxu0 0.0
    %843 = vmatpush1.msra.mxu0 0.0
    %844 = vmatprep.subr.mxu0 0.0
    %845 = vmatpush1.msra.mxu0 0.0
    %846 = vmatprep.subr.mxu0 0.0
    %847 = vmatpush1.msra.mxu0 0.0
    %848 = vmatprep.mubr.f32.mxu0 0.0
    %v849 = vand.u32 %v421, 4294901760
    %v850 = vsub.f32 %v421, %v849
    %v851 = vand.u32 %v850, 4294901760
    %852 = vmatmul.mubr.f32.gmra.mrb[0].mxu0 %v851
    %v853 = vpop.f32.mrb[0].mxu0
    %v854 = vadd.f32 %v765, %v853
    %v855 = vpop.f32.mrb[0].mxu0
    %856 = vdwg.mxu0
    %857 = vmatprep.subr.mxu0 0.0
    %v858 = vand.u32 %v353, 4294901760
    %v859 = vsub.f32 %v353, %v858
    %v860 = vand.u32 %v859, 4294901760
    %861 = vmatpush1.msra.mxu0 %v860
    %862 = vmatprep.subr.mxu0 0.0
    %v863 = vand.u32 %v354, 4294901760
    %v864 = vsub.f32 %v354, %v863
    %v865 = vand.u32 %v864, 4294901760
    %866 = vmatpush1.msra.mxu0 %v865
    %867 = vmatprep.subr.mxu0 0.0
    %v868 = vand.u32 %v355, 4294901760
    %v869 = vsub.f32 %v355, %v868
    %v870 = vand.u32 %v869, 4294901760
    %871 = vmatpush1.msra.mxu0 %v870
    %872 = vmatprep.subr.mxu0 0.0
    %v873 = vand.u32 %v356, 4294901760
    %v874 = vsub.f32 %v356, %v873
    %v875 = vand.u32 %v874, 4294901760
    %876 = vmatpush1.msra.mxu0 %v875
    %877 = vmatprep.subr.mxu0 0.0
    %v878 = vand.u32 %v357, 4294901760
    %v879 = vsub.f32 %v357, %v878
    %v880 = vand.u32 %v879, 4294901760
    %881 = vmatpush1.msra.mxu0 %v880
    %882 = vmatprep.subr.mxu0 0.0
    %v883 = vand.u32 %v358, 4294901760
    %v884 = vsub.f32 %v358, %v883
    %v885 = vand.u32 %v884, 4294901760
    %886 = vmatpush1.msra.mxu0 %v885
    %887 = vmatprep.subr.mxu0 0.0
    %v888 = vand.u32 %v359, 4294901760
    %v889 = vsub.f32 %v359, %v888
    %v890 = vand.u32 %v889, 4294901760
    %891 = vmatpush1.msra.mxu0 %v890
    %892 = vmatprep.subr.mxu0 0.0
    %v893 = vand.u32 %v360, 4294901760
    %v894 = vsub.f32 %v360, %v893
    %v895 = vand.u32 %v894, 4294901760
    %896 = vmatpush1.msra.mxu0 %v895
    %897 = vmatprep.subr.mxu0 0.0
    %v898 = vand.u32 %v361, 4294901760
    %v899 = vsub.f32 %v361, %v898
    %v900 = vand.u32 %v899, 4294901760
    %901 = vmatpush1.msra.mxu0 %v900
    %902 = vmatprep.subr.mxu0 0.0
    %v903 = vand.u32 %v362, 4294901760
    %v904 = vsub.f32 %v362, %v903
    %v905 = vand.u32 %v904, 4294901760
    %906 = vmatpush1.msra.mxu0 %v905
    %907 = vmatprep.subr.mxu0 0.0
    %v908 = vand.u32 %v363, 4294901760
    %v909 = vsub.f32 %v363, %v908
    %v910 = vand.u32 %v909, 4294901760
    %911 = vmatpush1.msra.mxu0 %v910
    %912 = vmatprep.subr.mxu0 0.0
    %v913 = vand.u32 %v364, 4294901760
    %v914 = vsub.f32 %v364, %v913
    %v915 = vand.u32 %v914, 4294901760
    %916 = vmatpush1.msra.mxu0 %v915
    %917 = vmatprep.subr.mxu0 0.0
    %v918 = vand.u32 %v365, 4294901760
    %v919 = vsub.f32 %v365, %v918
    %v920 = vand.u32 %v919, 4294901760
    %921 = vmatpush1.msra.mxu0 %v920
    %922 = vmatprep.subr.mxu0 0.0
    %v923 = vand.u32 %v366, 4294901760
    %v924 = vsub.f32 %v366, %v923
    %v925 = vand.u32 %v924, 4294901760
    %926 = vmatpush1.msra.mxu0 %v925
    %927 = vmatprep.subr.mxu0 0.0
    %v928 = vand.u32 %v367, 4294901760
    %v929 = vsub.f32 %v367, %v928
    %v930 = vand.u32 %v929, 4294901760
    %931 = vmatpush1.msra.mxu0 %v930
    %932 = vmatprep.subr.mxu0 0.0
    %v933 = vand.u32 %v368, 4294901760
    %v934 = vsub.f32 %v368, %v933
    %v935 = vand.u32 %v934, 4294901760
    %936 = vmatpush1.msra.mxu0 %v935
    %937 = vmatprep.subr.mxu0 0.0
    %938 = vmatpush1.msra.mxu0 0.0
    %939 = vmatprep.subr.mxu0 0.0
    %940 = vmatpush1.msra.mxu0 0.0
    %941 = vmatprep.subr.mxu0 0.0
    %942 = vmatpush1.msra.mxu0 0.0
    %943 = vmatprep.subr.mxu0 0.0
    %944 = vmatpush1.msra.mxu0 0.0
    %945 = vmatprep.subr.mxu0 0.0
    %946 = vmatpush1.msra.mxu0 0.0
    %947 = vmatprep.subr.mxu0 0.0
    %948 = vmatpush1.msra.mxu0 0.0
    %949 = vmatprep.subr.mxu0 0.0
    %950 = vmatpush1.msra.mxu0 0.0
    %951 = vmatprep.subr.mxu0 0.0
    %952 = vmatpush1.msra.mxu0 0.0
    %953 = vmatprep.subr.mxu0 0.0
    %954 = vmatpush1.msra.mxu0 0.0
    %955 = vmatprep.subr.mxu0 0.0
    %956 = vmatpush1.msra.mxu0 0.0
    %957 = vmatprep.subr.mxu0 0.0
    %958 = vmatpush1.msra.mxu0 0.0
    %959 = vmatprep.subr.mxu0 0.0
    %960 = vmatpush1.msra.mxu0 0.0
    %961 = vmatprep.subr.mxu0 0.0
    %962 = vmatpush1.msra.mxu0 0.0
    %963 = vmatprep.subr.mxu0 0.0
    %964 = vmatpush1.msra.mxu0 0.0
    %965 = vmatprep.subr.mxu0 0.0
    %966 = vmatpush1.msra.mxu0 0.0
    %967 = vmatprep.subr.mxu0 0.0
    %968 = vmatpush1.msra.mxu0 0.0
    %969 = vmatprep.mubr.f32.mxu0 0.0
    %v970 = vand.u32 %v421, 4294901760
    %971 = vmatmul.mubr.f32.gmra.mrb[0].mxu0 %v970
    %v972 = vpop.f32.mrb[0].mxu0
    %v973 = vadd.f32 %v854, %v972
    %v974 = vpop.f32.mrb[0].mxu0
    %975 = vdwg.mxu0
    %976 = vmatprep.subr.mxu0 0.0
    %v977 = vand.u32 %v353, 4294901760
    %978 = vmatpush1.msra.mxu0 %v977
    %979 = vmatprep.subr.mxu0 0.0
    %v980 = vand.u32 %v354, 4294901760
    %981 = vmatpush1.msra.mxu0 %v980
    %982 = vmatprep.subr.mxu0 0.0
    %v983 = vand.u32 %v355, 4294901760
    %984 = vmatpush1.msra.mxu0 %v983
    %985 = vmatprep.subr.mxu0 0.0
    %v986 = vand.u32 %v356, 4294901760
    %987 = vmatpush1.msra.mxu0 %v986
    %988 = vmatprep.subr.mxu0 0.0
    %v989 = vand.u32 %v357, 4294901760
    %990 = vmatpush1.msra.mxu0 %v989
    %991 = vmatprep.subr.mxu0 0.0
    %v992 = vand.u32 %v358, 4294901760
    %993 = vmatpush1.msra.mxu0 %v992
    %994 = vmatprep.subr.mxu0 0.0
    %v995 = vand.u32 %v359, 4294901760
    %996 = vmatpush1.msra.mxu0 %v995
    %997 = vmatprep.subr.mxu0 0.0
    %v998 = vand.u32 %v360, 4294901760
    %999 = vmatpush1.msra.mxu0 %v998
    %1000 = vmatprep.subr.mxu0 0.0
    %v1001 = vand.u32 %v361, 4294901760
    %1002 = vmatpush1.msra.mxu0 %v1001
    %1003 = vmatprep.subr.mxu0 0.0
    %v1004 = vand.u32 %v362, 4294901760
    %1005 = vmatpush1.msra.mxu0 %v1004
    %1006 = vmatprep.subr.mxu0 0.0
    %v1007 = vand.u32 %v363, 4294901760
    %1008 = vmatpush1.msra.mxu0 %v1007
    %1009 = vmatprep.subr.mxu0 0.0
    %v1010 = vand.u32 %v364, 4294901760
    %1011 = vmatpush1.msra.mxu0 %v1010
    %1012 = vmatprep.subr.mxu0 0.0
    %v1013 = vand.u32 %v365, 4294901760
    %1014 = vmatpush1.msra.mxu0 %v1013
    %1015 = vmatprep.subr.mxu0 0.0
    %v1016 = vand.u32 %v366, 4294901760
    %1017 = vmatpush1.msra.mxu0 %v1016
    %1018 = vmatprep.subr.mxu0 0.0
    %v1019 = vand.u32 %v367, 4294901760
    %1020 = vmatpush1.msra.mxu0 %v1019
    %1021 = vmatprep.subr.mxu0 0.0
    %v1022 = vand.u32 %v368, 4294901760
    %1023 = vmatpush1.msra.mxu0 %v1022
    %1024 = vmatprep.subr.mxu0 0.0
    %1025 = vmatpush1.msra.mxu0 0.0
    %1026 = vmatprep.subr.mxu0 0.0
    %1027 = vmatpush1.msra.mxu0 0.0
    %1028 = vmatprep.subr.mxu0 0.0
    %1029 = vmatpush1.msra.mxu0 0.0
    %1030 = vmatprep.subr.mxu0 0.0
    %1031 = vmatpush1.msra.mxu0 0.0
    %1032 = vmatprep.subr.mxu0 0.0
    %1033 = vmatpush1.msra.mxu0 0.0
    %1034 = vmatprep.subr.mxu0 0.0
    %1035 = vmatpush1.msra.mxu0 0.0
    %1036 = vmatprep.subr.mxu0 0.0
    %1037 = vmatpush1.msra.mxu0 0.0
    %1038 = vmatprep.subr.mxu0 0.0
    %1039 = vmatpush1.msra.mxu0 0.0
    %1040 = vmatprep.subr.mxu0 0.0
    %1041 = vmatpush1.msra.mxu0 0.0
    %1042 = vmatprep.subr.mxu0 0.0
    %1043 = vmatpush1.msra.mxu0 0.0
    %1044 = vmatprep.subr.mxu0 0.0
    %1045 = vmatpush1.msra.mxu0 0.0
    %1046 = vmatprep.subr.mxu0 0.0
    %1047 = vmatpush1.msra.mxu0 0.0
    %1048 = vmatprep.subr.mxu0 0.0
    %1049 = vmatpush1.msra.mxu0 0.0
    %1050 = vmatprep.subr.mxu0 0.0
    %1051 = vmatpush1.msra.mxu0 0.0
    %1052 = vmatprep.subr.mxu0 0.0
    %1053 = vmatpush1.msra.mxu0 0.0
    %1054 = vmatprep.subr.mxu0 0.0
    %1055 = vmatpush1.msra.mxu0 0.0
    %1056 = vmatprep.mubr.f32.mxu0 0.0
    %v1057 = vand.u32 %v421, 4294901760
    %1058 = vmatmul.mubr.f32.gmra.mrb[0].mxu0 %v1057
    %v1059 = vpop.f32.mrb[0].mxu0
    %v1060 = vadd.f32 %v973, %v1059
    %v1061 = vpop.f32.mrb[0].mxu0
    %1062 = vdwg.mxu0
    %1063 = vmatprep.subr.mxu0 0.0
    %v1064 = vand.u32 %v405, 4294901760
    %1065 = vmatpush1.msra.mxu0 %v1064
    %1066 = vmatprep.subr.mxu0 0.0
    %v1067 = vand.u32 %v406, 4294901760
    %1068 = vmatpush1.msra.mxu0 %v1067
    %1069 = vmatprep.subr.mxu0 0.0
    %v1070 = vand.u32 %v407, 4294901760
    %1071 = vmatpush1.msra.mxu0 %v1070
    %1072 = vmatprep.subr.mxu0 0.0
    %v1073 = vand.u32 %v408, 4294901760
    %1074 = vmatpush1.msra.mxu0 %v1073
    %1075 = vmatprep.subr.mxu0 0.0
    %v1076 = vand.u32 %v409, 4294901760
    %1077 = vmatpush1.msra.mxu0 %v1076
    %1078 = vmatprep.subr.mxu0 0.0
    %v1079 = vand.u32 %v410, 4294901760
    %1080 = vmatpush1.msra.mxu0 %v1079
    %1081 = vmatprep.subr.mxu0 0.0
    %v1082 = vand.u32 %v411, 4294901760
    %1083 = vmatpush1.msra.mxu0 %v1082
    %1084 = vmatprep.subr.mxu0 0.0
    %v1085 = vand.u32 %v412, 4294901760
    %1086 = vmatpush1.msra.mxu0 %v1085
    %1087 = vmatprep.subr.mxu0 0.0
    %v1088 = vand.u32 %v413, 4294901760
    %1089 = vmatpush1.msra.mxu0 %v1088
    %1090 = vmatprep.subr.mxu0 0.0
    %v1091 = vand.u32 %v414, 4294901760
    %1092 = vmatpush1.msra.mxu0 %v1091
    %1093 = vmatprep.subr.mxu0 0.0
    %v1094 = vand.u32 %v415, 4294901760
    %1095 = vmatpush1.msra.mxu0 %v1094
    %1096 = vmatprep.subr.mxu0 0.0
    %v1097 = vand.u32 %v416, 4294901760
    %1098 = vmatpush1.msra.mxu0 %v1097
    %1099 = vmatprep.subr.mxu0 0.0
    %v1100 = vand.u32 %v417, 4294901760
    %1101 = vmatpush1.msra.mxu0 %v1100
    %1102 = vmatprep.subr.mxu0 0.0
    %v1103 = vand.u32 %v418, 4294901760
    %1104 = vmatpush1.msra.mxu0 %v1103
    %1105 = vmatprep.subr.mxu0 0.0
    %v1106 = vand.u32 %v419, 4294901760
    %1107 = vmatpush1.msra.mxu0 %v1106
    %1108 = vmatprep.subr.mxu0 0.0
    %v1109 = vand.u32 %v420, 4294901760
    %1110 = vmatpush1.msra.mxu0 %v1109
    %1111 = vmatprep.subr.mxu0 0.0
    %1112 = vmatpush1.msra.mxu0 0.0
    %1113 = vmatprep.subr.mxu0 0.0
    %1114 = vmatpush1.msra.mxu0 0.0
    %1115 = vmatprep.subr.mxu0 0.0
    %1116 = vmatpush1.msra.mxu0 0.0
    %1117 = vmatprep.subr.mxu0 0.0
    %1118 = vmatpush1.msra.mxu0 0.0
    %1119 = vmatprep.subr.mxu0 0.0
    %1120 = vmatpush1.msra.mxu0 0.0
    %1121 = vmatprep.subr.mxu0 0.0
    %1122 = vmatpush1.msra.mxu0 0.0
    %1123 = vmatprep.subr.mxu0 0.0
    %1124 = vmatpush1.msra.mxu0 0.0
    %1125 = vmatprep.subr.mxu0 0.0
    %1126 = vmatpush1.msra.mxu0 0.0
    %1127 = vmatprep.subr.mxu0 0.0
    %1128 = vmatpush1.msra.mxu0 0.0
    %1129 = vmatprep.subr.mxu0 0.0
    %1130 = vmatpush1.msra.mxu0 0.0
    %1131 = vmatprep.subr.mxu0 0.0
    %1132 = vmatpush1.msra.mxu0 0.0
    %1133 = vmatprep.subr.mxu0 0.0
    %1134 = vmatpush1.msra.mxu0 0.0
    %1135 = vmatprep.subr.mxu0 0.0
    %1136 = vmatpush1.msra.mxu0 0.0
    %1137 = vmatprep.subr.mxu0 0.0
    %1138 = vmatpush1.msra.mxu0 0.0
    %1139 = vmatprep.subr.mxu0 0.0
    %1140 = vmatpush1.msra.mxu0 0.0
    %1141 = vmatprep.subr.mxu0 0.0
    %1142 = vmatpush1.msra.mxu0 0.0
    %1143 = vmatprep.mubr.f32.mxu0 0.0
    %v1144 = vand.u32 %v421, 4294901760
    %v1145 = vsub.f32 %v421, %v1144
    %v1146 = vand.u32 %v1145, 4294901760
    %v1147 = vsub.f32 %v1145, %v1146
    %v1148 = vand.u32 %v1147, 4294901760
    %1149 = vmatmul.mubr.f32.gmra.mrb[0].mxu0 %v1148
    %v1150 = vpop.f32.mrb[0].mxu0
    %v1151 = vadd.f32 0.0, %v1150
    %v1152 = vpop.f32.mrb[0].mxu0
    %1153 = vdwg.mxu0
    %1154 = vmatprep.subr.mxu0 0.0
    %v1155 = vand.u32 %v405, 4294901760
    %v1156 = vsub.f32 %v405, %v1155
    %v1157 = vand.u32 %v1156, 4294901760
    %v1158 = vsub.f32 %v1156, %v1157
    %v1159 = vand.u32 %v1158, 4294901760
    %1160 = vmatpush1.msra.mxu0 %v1159
    %1161 = vmatprep.subr.mxu0 0.0
    %v1162 = vand.u32 %v406, 4294901760
    %v1163 = vsub.f32 %v406, %v1162
    %v1164 = vand.u32 %v1163, 4294901760
    %v1165 = vsub.f32 %v1163, %v1164
    %v1166 = vand.u32 %v1165, 4294901760
    %1167 = vmatpush1.msra.mxu0 %v1166
    %1168 = vmatprep.subr.mxu0 0.0
    %v1169 = vand.u32 %v407, 4294901760
    %v1170 = vsub.f32 %v407, %v1169
    %v1171 = vand.u32 %v1170, 4294901760
    %v1172 = vsub.f32 %v1170, %v1171
    %v1173 = vand.u32 %v1172, 4294901760
    %1174 = vmatpush1.msra.mxu0 %v1173
    %1175 = vmatprep.subr.mxu0 0.0
    %v1176 = vand.u32 %v408, 4294901760
    %v1177 = vsub.f32 %v408, %v1176
    %v1178 = vand.u32 %v1177, 4294901760
    %v1179 = vsub.f32 %v1177, %v1178
    %v1180 = vand.u32 %v1179, 4294901760
    %1181 = vmatpush1.msra.mxu0 %v1180
    %1182 = vmatprep.subr.mxu0 0.0
    %v1183 = vand.u32 %v409, 4294901760
    %v1184 = vsub.f32 %v409, %v1183
    %v1185 = vand.u32 %v1184, 4294901760
    %v1186 = vsub.f32 %v1184, %v1185
    %v1187 = vand.u32 %v1186, 4294901760
    %1188 = vmatpush1.msra.mxu0 %v1187
    %1189 = vmatprep.subr.mxu0 0.0
    %v1190 = vand.u32 %v410, 4294901760
    %v1191 = vsub.f32 %v410, %v1190
    %v1192 = vand.u32 %v1191, 4294901760
    %v1193 = vsub.f32 %v1191, %v1192
    %v1194 = vand.u32 %v1193, 4294901760
    %1195 = vmatpush1.msra.mxu0 %v1194
    %1196 = vmatprep.subr.mxu0 0.0
    %v1197 = vand.u32 %v411, 4294901760
    %v1198 = vsub.f32 %v411, %v1197
    %v1199 = vand.u32 %v1198, 4294901760
    %v1200 = vsub.f32 %v1198, %v1199
    %v1201 = vand.u32 %v1200, 4294901760
    %1202 = vmatpush1.msra.mxu0 %v1201
    %1203 = vmatprep.subr.mxu0 0.0
    %v1204 = vand.u32 %v412, 4294901760
    %v1205 = vsub.f32 %v412, %v1204
    %v1206 = vand.u32 %v1205, 4294901760
    %v1207 = vsub.f32 %v1205, %v1206
    %v1208 = vand.u32 %v1207, 4294901760
    %1209 = vmatpush1.msra.mxu0 %v1208
    %1210 = vmatprep.subr.mxu0 0.0
    %v1211 = vand.u32 %v413, 4294901760
    %v1212 = vsub.f32 %v413, %v1211
    %v1213 = vand.u32 %v1212, 4294901760
    %v1214 = vsub.f32 %v1212, %v1213
    %v1215 = vand.u32 %v1214, 4294901760
    %1216 = vmatpush1.msra.mxu0 %v1215
    %1217 = vmatprep.subr.mxu0 0.0
    %v1218 = vand.u32 %v414, 4294901760
    %v1219 = vsub.f32 %v414, %v1218
    %v1220 = vand.u32 %v1219, 4294901760
    %v1221 = vsub.f32 %v1219, %v1220
    %v1222 = vand.u32 %v1221, 4294901760
    %1223 = vmatpush1.msra.mxu0 %v1222
    %1224 = vmatprep.subr.mxu0 0.0
    %v1225 = vand.u32 %v415, 4294901760
    %v1226 = vsub.f32 %v415, %v1225
    %v1227 = vand.u32 %v1226, 4294901760
    %v1228 = vsub.f32 %v1226, %v1227
    %v1229 = vand.u32 %v1228, 4294901760
    %1230 = vmatpush1.msra.mxu0 %v1229
    %1231 = vmatprep.subr.mxu0 0.0
    %v1232 = vand.u32 %v416, 4294901760
    %v1233 = vsub.f32 %v416, %v1232
    %v1234 = vand.u32 %v1233, 4294901760
    %v1235 = vsub.f32 %v1233, %v1234
    %v1236 = vand.u32 %v1235, 4294901760
    %1237 = vmatpush1.msra.mxu0 %v1236
    %1238 = vmatprep.subr.mxu0 0.0
    %v1239 = vand.u32 %v417, 4294901760
    %v1240 = vsub.f32 %v417, %v1239
    %v1241 = vand.u32 %v1240, 4294901760
    %v1242 = vsub.f32 %v1240, %v1241
    %v1243 = vand.u32 %v1242, 4294901760
    %1244 = vmatpush1.msra.mxu0 %v1243
    %1245 = vmatprep.subr.mxu0 0.0
    %v1246 = vand.u32 %v418, 4294901760
    %v1247 = vsub.f32 %v418, %v1246
    %v1248 = vand.u32 %v1247, 4294901760
    %v1249 = vsub.f32 %v1247, %v1248
    %v1250 = vand.u32 %v1249, 4294901760
    %1251 = vmatpush1.msra.mxu0 %v1250
    %1252 = vmatprep.subr.mxu0 0.0
    %v1253 = vand.u32 %v419, 4294901760
    %v1254 = vsub.f32 %v419, %v1253
    %v1255 = vand.u32 %v1254, 4294901760
    %v1256 = vsub.f32 %v1254, %v1255
    %v1257 = vand.u32 %v1256, 4294901760
    %1258 = vmatpush1.msra.mxu0 %v1257
    %1259 = vmatprep.subr.mxu0 0.0
    %v1260 = vand.u32 %v420, 4294901760
    %v1261 = vsub.f32 %v420, %v1260
    %v1262 = vand.u32 %v1261, 4294901760
    %v1263 = vsub.f32 %v1261, %v1262
    %v1264 = vand.u32 %v1263, 4294901760
    %1265 = vmatpush1.msra.mxu0 %v1264
    %1266 = vmatprep.subr.mxu0 0.0
    %1267 = vmatpush1.msra.mxu0 0.0
    %1268 = vmatprep.subr.mxu0 0.0
    %1269 = vmatpush1.msra.mxu0 0.0
    %1270 = vmatprep.subr.mxu0 0.0
    %1271 = vmatpush1.msra.mxu0 0.0
    %1272 = vmatprep.subr.mxu0 0.0
    %1273 = vmatpush1.msra.mxu0 0.0
    %1274 = vmatprep.subr.mxu0 0.0
    %1275 = vmatpush1.msra.mxu0 0.0
    %1276 = vmatprep.subr.mxu0 0.0
    %1277 = vmatpush1.msra.mxu0 0.0
    %1278 = vmatprep.subr.mxu0 0.0
    %1279 = vmatpush1.msra.mxu0 0.0
    %1280 = vmatprep.subr.mxu0 0.0
    %1281 = vmatpush1.msra.mxu0 0.0
    %1282 = vmatprep.subr.mxu0 0.0
    %1283 = vmatpush1.msra.mxu0 0.0
    %1284 = vmatprep.subr.mxu0 0.0
    %1285 = vmatpush1.msra.mxu0 0.0
    %1286 = vmatprep.subr.mxu0 0.0
    %1287 = vmatpush1.msra.mxu0 0.0
    %1288 = vmatprep.subr.mxu0 0.0
    %1289 = vmatpush1.msra.mxu0 0.0
    %1290 = vmatprep.subr.mxu0 0.0
    %1291 = vmatpush1.msra.mxu0 0.0
    %1292 = vmatprep.subr.mxu0 0.0
    %1293 = vmatpush1.msra.mxu0 0.0
    %1294 = vmatprep.subr.mxu0 0.0
    %1295 = vmatpush1.msra.mxu0 0.0
    %1296 = vmatprep.subr.mxu0 0.0
    %1297 = vmatpush1.msra.mxu0 0.0
    %1298 = vmatprep.mubr.f32.mxu0 0.0
    %v1299 = vand.u32 %v421, 4294901760
    %1300 = vmatmul.mubr.f32.gmra.mrb[0].mxu0 %v1299
    %v1301 = vpop.f32.mrb[0].mxu0
    %v1302 = vadd.f32 %v1151, %v1301
    %v1303 = vpop.f32.mrb[0].mxu0
    %1304 = vdwg.mxu0
    %1305 = vmatprep.subr.mxu0 0.0
    %v1306 = vand.u32 %v405, 4294901760
    %v1307 = vsub.f32 %v405, %v1306
    %1308 = vmatpush1.msra.mxu0 %v1307
    %1309 = vmatprep.subr.mxu0 0.0
    %v1310 = vand.u32 %v406, 4294901760
    %v1311 = vsub.f32 %v406, %v1310
    %1312 = vmatpush1.msra.mxu0 %v1311
    %1313 = vmatprep.subr.mxu0 0.0
    %v1314 = vand.u32 %v407, 4294901760
    %v1315 = vsub.f32 %v407, %v1314
    %1316 = vmatpush1.msra.mxu0 %v1315
    %1317 = vmatprep.subr.mxu0 0.0
    %v1318 = vand.u32 %v408, 4294901760
    %v1319 = vsub.f32 %v408, %v1318
    %1320 = vmatpush1.msra.mxu0 %v1319
    %1321 = vmatprep.subr.mxu0 0.0
    %v1322 = vand.u32 %v409, 4294901760
    %v1323 = vsub.f32 %v409, %v1322
    %1324 = vmatpush1.msra.mxu0 %v1323
    %1325 = vmatprep.subr.mxu0 0.0
    %v1326 = vand.u32 %v410, 4294901760
    %v1327 = vsub.f32 %v410, %v1326
    %1328 = vmatpush1.msra.mxu0 %v1327
    %1329 = vmatprep.subr.mxu0 0.0
    %v1330 = vand.u32 %v411, 4294901760
    %v1331 = vsub.f32 %v411, %v1330
    %1332 = vmatpush1.msra.mxu0 %v1331
    %1333 = vmatprep.subr.mxu0 0.0
    %v1334 = vand.u32 %v412, 4294901760
    %v1335 = vsub.f32 %v412, %v1334
    %1336 = vmatpush1.msra.mxu0 %v1335
    %1337 = vmatprep.subr.mxu0 0.0
    %v1338 = vand.u32 %v413, 4294901760
    %v1339 = vsub.f32 %v413, %v1338
    %1340 = vmatpush1.msra.mxu0 %v1339
    %1341 = vmatprep.subr.mxu0 0.0
    %v1342 = vand.u32 %v414, 4294901760
    %v1343 = vsub.f32 %v414, %v1342
    %1344 = vmatpush1.msra.mxu0 %v1343
    %1345 = vmatprep.subr.mxu0 0.0
    %v1346 = vand.u32 %v415, 4294901760
    %v1347 = vsub.f32 %v415, %v1346
    %1348 = vmatpush1.msra.mxu0 %v1347
    %1349 = vmatprep.subr.mxu0 0.0
    %v1350 = vand.u32 %v416, 4294901760
    %v1351 = vsub.f32 %v416, %v1350
    %1352 = vmatpush1.msra.mxu0 %v1351
    %1353 = vmatprep.subr.mxu0 0.0
    %v1354 = vand.u32 %v417, 4294901760
    %v1355 = vsub.f32 %v417, %v1354
    %1356 = vmatpush1.msra.mxu0 %v1355
    %1357 = vmatprep.subr.mxu0 0.0
    %v1358 = vand.u32 %v418, 4294901760
    %v1359 = vsub.f32 %v418, %v1358
    %1360 = vmatpush1.msra.mxu0 %v1359
    %1361 = vmatprep.subr.mxu0 0.0
    %v1362 = vand.u32 %v419, 4294901760
    %v1363 = vsub.f32 %v419, %v1362
    %1364 = vmatpush1.msra.mxu0 %v1363
    %1365 = vmatprep.subr.mxu0 0.0
    %v1366 = vand.u32 %v420, 4294901760
    %v1367 = vsub.f32 %v420, %v1366
    %1368 = vmatpush1.msra.mxu0 %v1367
    %1369 = vmatprep.subr.mxu0 0.0
    %1370 = vmatpush1.msra.mxu0 0.0
    %1371 = vmatprep.subr.mxu0 0.0
    %1372 = vmatpush1.msra.mxu0 0.0
    %1373 = vmatprep.subr.mxu0 0.0
    %1374 = vmatpush1.msra.mxu0 0.0
    %1375 = vmatprep.subr.mxu0 0.0
    %1376 = vmatpush1.msra.mxu0 0.0
    %1377 = vmatprep.subr.mxu0 0.0
    %1378 = vmatpush1.msra.mxu0 0.0
    %1379 = vmatprep.subr.mxu0 0.0
    %1380 = vmatpush1.msra.mxu0 0.0
    %1381 = vmatprep.subr.mxu0 0.0
    %1382 = vmatpush1.msra.mxu0 0.0
    %1383 = vmatprep.subr.mxu0 0.0
    %1384 = vmatpush1.msra.mxu0 0.0
    %1385 = vmatprep.subr.mxu0 0.0
    %1386 = vmatpush1.msra.mxu0 0.0
    %1387 = vmatprep.subr.mxu0 0.0
    %1388 = vmatpush1.msra.mxu0 0.0
    %1389 = vmatprep.subr.mxu0 0.0
    %1390 = vmatpush1.msra.mxu0 0.0
    %1391 = vmatprep.subr.mxu0 0.0
    %1392 = vmatpush1.msra.mxu0 0.0
    %1393 = vmatprep.subr.mxu0 0.0
    %1394 = vmatpush1.msra.mxu0 0.0
    %1395 = vmatprep.subr.mxu0 0.0
    %1396 = vmatpush1.msra.mxu0 0.0
    %1397 = vmatprep.subr.mxu0 0.0
    %1398 = vmatpush1.msra.mxu0 0.0
    %1399 = vmatprep.subr.mxu0 0.0
    %1400 = vmatpush1.msra.mxu0 0.0
    %1401 = vmatprep.mubr.f32.mxu0 0.0
    %v1402 = vand.u32 %v421, 4294901760
    %v1403 = vsub.f32 %v421, %v1402
    %1404 = vmatmul.mubr.f32.gmra.mrb[0].mxu0 %v1403
    %v1405 = vpop.f32.mrb[0].mxu0
    %v1406 = vadd.f32 %v1302, %v1405
    %v1407 = vpop.f32.mrb[0].mxu0
    %1408 = vdwg.mxu0
    %1409 = vmatprep.subr.mxu0 0.0
    %v1410 = vand.u32 %v405, 4294901760
    %1411 = vmatpush1.msra.mxu0 %v1410
    %1412 = vmatprep.subr.mxu0 0.0
    %v1413 = vand.u32 %v406, 4294901760
    %1414 = vmatpush1.msra.mxu0 %v1413
    %1415 = vmatprep.subr.mxu0 0.0
    %v1416 = vand.u32 %v407, 4294901760
    %1417 = vmatpush1.msra.mxu0 %v1416
    %1418 = vmatprep.subr.mxu0 0.0
    %v1419 = vand.u32 %v408, 4294901760
    %1420 = vmatpush1.msra.mxu0 %v1419
    %1421 = vmatprep.subr.mxu0 0.0
    %v1422 = vand.u32 %v409, 4294901760
    %1423 = vmatpush1.msra.mxu0 %v1422
    %1424 = vmatprep.subr.mxu0 0.0
    %v1425 = vand.u32 %v410, 4294901760
    %1426 = vmatpush1.msra.mxu0 %v1425
    %1427 = vmatprep.subr.mxu0 0.0
    %v1428 = vand.u32 %v411, 4294901760
    %1429 = vmatpush1.msra.mxu0 %v1428
    %1430 = vmatprep.subr.mxu0 0.0
    %v1431 = vand.u32 %v412, 4294901760
    %1432 = vmatpush1.msra.mxu0 %v1431
    %1433 = vmatprep.subr.mxu0 0.0
    %v1434 = vand.u32 %v413, 4294901760
    %1435 = vmatpush1.msra.mxu0 %v1434
    %1436 = vmatprep.subr.mxu0 0.0
    %v1437 = vand.u32 %v414, 4294901760
    %1438 = vmatpush1.msra.mxu0 %v1437
    %1439 = vmatprep.subr.mxu0 0.0
    %v1440 = vand.u32 %v415, 4294901760
    %1441 = vmatpush1.msra.mxu0 %v1440
    %1442 = vmatprep.subr.mxu0 0.0
    %v1443 = vand.u32 %v416, 4294901760
    %1444 = vmatpush1.msra.mxu0 %v1443
    %1445 = vmatprep.subr.mxu0 0.0
    %v1446 = vand.u32 %v417, 4294901760
    %1447 = vmatpush1.msra.mxu0 %v1446
    %1448 = vmatprep.subr.mxu0 0.0
    %v1449 = vand.u32 %v418, 4294901760
    %1450 = vmatpush1.msra.mxu0 %v1449
    %1451 = vmatprep.subr.mxu0 0.0
    %v1452 = vand.u32 %v419, 4294901760
    %1453 = vmatpush1.msra.mxu0 %v1452
    %1454 = vmatprep.subr.mxu0 0.0
    %v1455 = vand.u32 %v420, 4294901760
    %1456 = vmatpush1.msra.mxu0 %v1455
    %1457 = vmatprep.subr.mxu0 0.0
    %1458 = vmatpush1.msra.mxu0 0.0
    %1459 = vmatprep.subr.mxu0 0.0
    %1460 = vmatpush1.msra.mxu0 0.0
    %1461 = vmatprep.subr.mxu0 0.0
    %1462 = vmatpush1.msra.mxu0 0.0
    %1463 = vmatprep.subr.mxu0 0.0
    %1464 = vmatpush1.msra.mxu0 0.0
    %1465 = vmatprep.subr.mxu0 0.0
    %1466 = vmatpush1.msra.mxu0 0.0
    %1467 = vmatprep.subr.mxu0 0.0
    %1468 = vmatpush1.msra.mxu0 0.0
    %1469 = vmatprep.subr.mxu0 0.0
    %1470 = vmatpush1.msra.mxu0 0.0
    %1471 = vmatprep.subr.mxu0 0.0
    %1472 = vmatpush1.msra.mxu0 0.0
    %1473 = vmatprep.subr.mxu0 0.0
    %1474 = vmatpush1.msra.mxu0 0.0
    %1475 = vmatprep.subr.mxu0 0.0
    %1476 = vmatpush1.msra.mxu0 0.0
    %1477 = vmatprep.subr.mxu0 0.0
    %1478 = vmatpush1.msra.mxu0 0.0
    %1479 = vmatprep.subr.mxu0 0.0
    %1480 = vmatpush1.msra.mxu0 0.0
    %1481 = vmatprep.subr.mxu0 0.0
    %1482 = vmatpush1.msra.mxu0 0.0
    %1483 = vmatprep.subr.mxu0 0.0
    %1484 = vmatpush1.msra.mxu0 0.0
    %1485 = vmatprep.subr.mxu0 0.0
    %1486 = vmatpush1.msra.mxu0 0.0
    %1487 = vmatprep.subr.mxu0 0.0
    %1488 = vmatpush1.msra.mxu0 0.0
    %1489 = vmatprep.mubr.f32.mxu0 0.0
    %v1490 = vand.u32 %v421, 4294901760
    %v1491 = vsub.f32 %v421, %v1490
    %v1492 = vand.u32 %v1491, 4294901760
    %1493 = vmatmul.mubr.f32.gmra.mrb[0].mxu0 %v1492
    %v1494 = vpop.f32.mrb[0].mxu0
    %v1495 = vadd.f32 %v1406, %v1494
    %v1496 = vpop.f32.mrb[0].mxu0
    %1497 = vdwg.mxu0
    %1498 = vmatprep.subr.mxu0 0.0
    %v1499 = vand.u32 %v405, 4294901760
    %v1500 = vsub.f32 %v405, %v1499
    %v1501 = vand.u32 %v1500, 4294901760
    %1502 = vmatpush1.msra.mxu0 %v1501
    %1503 = vmatprep.subr.mxu0 0.0
    %v1504 = vand.u32 %v406, 4294901760
    %v1505 = vsub.f32 %v406, %v1504
    %v1506 = vand.u32 %v1505, 4294901760
    %1507 = vmatpush1.msra.mxu0 %v1506
    %1508 = vmatprep.subr.mxu0 0.0
    %v1509 = vand.u32 %v407, 4294901760
    %v1510 = vsub.f32 %v407, %v1509
    %v1511 = vand.u32 %v1510, 4294901760
    %1512 = vmatpush1.msra.mxu0 %v1511
    %1513 = vmatprep.subr.mxu0 0.0
    %v1514 = vand.u32 %v408, 4294901760
    %v1515 = vsub.f32 %v408, %v1514
    %v1516 = vand.u32 %v1515, 4294901760
    %1517 = vmatpush1.msra.mxu0 %v1516
    %1518 = vmatprep.subr.mxu0 0.0
    %v1519 = vand.u32 %v409, 4294901760
    %v1520 = vsub.f32 %v409, %v1519
    %v1521 = vand.u32 %v1520, 4294901760
    %1522 = vmatpush1.msra.mxu0 %v1521
    %1523 = vmatprep.subr.mxu0 0.0
    %v1524 = vand.u32 %v410, 4294901760
    %v1525 = vsub.f32 %v410, %v1524
    %v1526 = vand.u32 %v1525, 4294901760
    %1527 = vmatpush1.msra.mxu0 %v1526
    %1528 = vmatprep.subr.mxu0 0.0
    %v1529 = vand.u32 %v411, 4294901760
    %v1530 = vsub.f32 %v411, %v1529
    %v1531 = vand.u32 %v1530, 4294901760
    %1532 = vmatpush1.msra.mxu0 %v1531
    %1533 = vmatprep.subr.mxu0 0.0
    %v1534 = vand.u32 %v412, 4294901760
    %v1535 = vsub.f32 %v412, %v1534
    %v1536 = vand.u32 %v1535, 4294901760
    %1537 = vmatpush1.msra.mxu0 %v1536
    %1538 = vmatprep.subr.mxu0 0.0
    %v1539 = vand.u32 %v413, 4294901760
    %v1540 = vsub.f32 %v413, %v1539
    %v1541 = vand.u32 %v1540, 4294901760
    %1542 = vmatpush1.msra.mxu0 %v1541
    %1543 = vmatprep.subr.mxu0 0.0
    %v1544 = vand.u32 %v414, 4294901760
    %v1545 = vsub.f32 %v414, %v1544
    %v1546 = vand.u32 %v1545, 4294901760
    %1547 = vmatpush1.msra.mxu0 %v1546
    %1548 = vmatprep.subr.mxu0 0.0
    %v1549 = vand.u32 %v415, 4294901760
    %v1550 = vsub.f32 %v415, %v1549
    %v1551 = vand.u32 %v1550, 4294901760
    %1552 = vmatpush1.msra.mxu0 %v1551
    %1553 = vmatprep.subr.mxu0 0.0
    %v1554 = vand.u32 %v416, 4294901760
    %v1555 = vsub.f32 %v416, %v1554
    %v1556 = vand.u32 %v1555, 4294901760
    %1557 = vmatpush1.msra.mxu0 %v1556
    %1558 = vmatprep.subr.mxu0 0.0
    %v1559 = vand.u32 %v417, 4294901760
    %v1560 = vsub.f32 %v417, %v1559
    %v1561 = vand.u32 %v1560, 4294901760
    %1562 = vmatpush1.msra.mxu0 %v1561
    %1563 = vmatprep.subr.mxu0 0.0
    %v1564 = vand.u32 %v418, 4294901760
    %v1565 = vsub.f32 %v418, %v1564
    %v1566 = vand.u32 %v1565, 4294901760
    %1567 = vmatpush1.msra.mxu0 %v1566
    %1568 = vmatprep.subr.mxu0 0.0
    %v1569 = vand.u32 %v419, 4294901760
    %v1570 = vsub.f32 %v419, %v1569
    %v1571 = vand.u32 %v1570, 4294901760
    %1572 = vmatpush1.msra.mxu0 %v1571
    %1573 = vmatprep.subr.mxu0 0.0
    %v1574 = vand.u32 %v420, 4294901760
    %v1575 = vsub.f32 %v420, %v1574
    %v1576 = vand.u32 %v1575, 4294901760
    %1577 = vmatpush1.msra.mxu0 %v1576
    %1578 = vmatprep.subr.mxu0 0.0
    %1579 = vmatpush1.msra.mxu0 0.0
    %1580 = vmatprep.subr.mxu0 0.0
    %1581 = vmatpush1.msra.mxu0 0.0
    %1582 = vmatprep.subr.mxu0 0.0
    %1583 = vmatpush1.msra.mxu0 0.0
    %1584 = vmatprep.subr.mxu0 0.0
    %1585 = vmatpush1.msra.mxu0 0.0
    %1586 = vmatprep.subr.mxu0 0.0
    %1587 = vmatpush1.msra.mxu0 0.0
    %1588 = vmatprep.subr.mxu0 0.0
    %1589 = vmatpush1.msra.mxu0 0.0
    %1590 = vmatprep.subr.mxu0 0.0
    %1591 = vmatpush1.msra.mxu0 0.0
    %1592 = vmatprep.subr.mxu0 0.0
    %1593 = vmatpush1.msra.mxu0 0.0
    %1594 = vmatprep.subr.mxu0 0.0
    %1595 = vmatpush1.msra.mxu0 0.0
    %1596 = vmatprep.subr.mxu0 0.0
    %1597 = vmatpush1.msra.mxu0 0.0
    %1598 = vmatprep.subr.mxu0 0.0
    %1599 = vmatpush1.msra.mxu0 0.0
    %1600 = vmatprep.subr.mxu0 0.0
    %1601 = vmatpush1.msra.mxu0 0.0
    %1602 = vmatprep.subr.mxu0 0.0
    %1603 = vmatpush1.msra.mxu0 0.0
    %1604 = vmatprep.subr.mxu0 0.0
    %1605 = vmatpush1.msra.mxu0 0.0
    %1606 = vmatprep.subr.mxu0 0.0
    %1607 = vmatpush1.msra.mxu0 0.0
    %1608 = vmatprep.subr.mxu0 0.0
    %1609 = vmatpush1.msra.mxu0 0.0
    %1610 = vmatprep.mubr.f32.mxu0 0.0
    %v1611 = vand.u32 %v421, 4294901760
    %1612 = vmatmul.mubr.f32.gmra.mrb[0].mxu0 %v1611
    %v1613 = vpop.f32.mrb[0].mxu0
    %v1614 = vadd.f32 %v1495, %v1613
    %v1615 = vpop.f32.mrb[0].mxu0
    %1616 = vdwg.mxu0
    %1617 = vmatprep.subr.mxu0 0.0
    %v1618 = vand.u32 %v405, 4294901760
    %1619 = vmatpush1.msra.mxu0 %v1618
    %1620 = vmatprep.subr.mxu0 0.0
    %v1621 = vand.u32 %v406, 4294901760
    %1622 = vmatpush1.msra.mxu0 %v1621
    %1623 = vmatprep.subr.mxu0 0.0
    %v1624 = vand.u32 %v407, 4294901760
    %1625 = vmatpush1.msra.mxu0 %v1624
    %1626 = vmatprep.subr.mxu0 0.0
    %v1627 = vand.u32 %v408, 4294901760
    %1628 = vmatpush1.msra.mxu0 %v1627
    %1629 = vmatprep.subr.mxu0 0.0
    %v1630 = vand.u32 %v409, 4294901760
    %1631 = vmatpush1.msra.mxu0 %v1630
    %1632 = vmatprep.subr.mxu0 0.0
    %v1633 = vand.u32 %v410, 4294901760
    %1634 = vmatpush1.msra.mxu0 %v1633
    %1635 = vmatprep.subr.mxu0 0.0
    %v1636 = vand.u32 %v411, 4294901760
    %1637 = vmatpush1.msra.mxu0 %v1636
    %1638 = vmatprep.subr.mxu0 0.0
    %v1639 = vand.u32 %v412, 4294901760
    %1640 = vmatpush1.msra.mxu0 %v1639
    %1641 = vmatprep.subr.mxu0 0.0
    %v1642 = vand.u32 %v413, 4294901760
    %1643 = vmatpush1.msra.mxu0 %v1642
    %1644 = vmatprep.subr.mxu0 0.0
    %v1645 = vand.u32 %v414, 4294901760
    %1646 = vmatpush1.msra.mxu0 %v1645
    %1647 = vmatprep.subr.mxu0 0.0
    %v1648 = vand.u32 %v415, 4294901760
    %1649 = vmatpush1.msra.mxu0 %v1648
    %1650 = vmatprep.subr.mxu0 0.0
    %v1651 = vand.u32 %v416, 4294901760
    %1652 = vmatpush1.msra.mxu0 %v1651
    %1653 = vmatprep.subr.mxu0 0.0
    %v1654 = vand.u32 %v417, 4294901760
    %1655 = vmatpush1.msra.mxu0 %v1654
    %1656 = vmatprep.subr.mxu0 0.0
    %v1657 = vand.u32 %v418, 4294901760
    %1658 = vmatpush1.msra.mxu0 %v1657
    %1659 = vmatprep.subr.mxu0 0.0
    %v1660 = vand.u32 %v419, 4294901760
    %1661 = vmatpush1.msra.mxu0 %v1660
    %1662 = vmatprep.subr.mxu0 0.0
    %v1663 = vand.u32 %v420, 4294901760
    %1664 = vmatpush1.msra.mxu0 %v1663
    %1665 = vmatprep.subr.mxu0 0.0
    %1666 = vmatpush1.msra.mxu0 0.0
    %1667 = vmatprep.subr.mxu0 0.0
    %1668 = vmatpush1.msra.mxu0 0.0
    %1669 = vmatprep.subr.mxu0 0.0
    %1670 = vmatpush1.msra.mxu0 0.0
    %1671 = vmatprep.subr.mxu0 0.0
    %1672 = vmatpush1.msra.mxu0 0.0
    %1673 = vmatprep.subr.mxu0 0.0
    %1674 = vmatpush1.msra.mxu0 0.0
    %1675 = vmatprep.subr.mxu0 0.0
    %1676 = vmatpush1.msra.mxu0 0.0
    %1677 = vmatprep.subr.mxu0 0.0
    %1678 = vmatpush1.msra.mxu0 0.0
    %1679 = vmatprep.subr.mxu0 0.0
    %1680 = vmatpush1.msra.mxu0 0.0
    %1681 = vmatprep.subr.mxu0 0.0
    %1682 = vmatpush1.msra.mxu0 0.0
    %1683 = vmatprep.subr.mxu0 0.0
    %1684 = vmatpush1.msra.mxu0 0.0
    %1685 = vmatprep.subr.mxu0 0.0
    %1686 = vmatpush1.msra.mxu0 0.0
    %1687 = vmatprep.subr.mxu0 0.0
    %1688 = vmatpush1.msra.mxu0 0.0
    %1689 = vmatprep.subr.mxu0 0.0
    %1690 = vmatpush1.msra.mxu0 0.0
    %1691 = vmatprep.subr.mxu0 0.0
    %1692 = vmatpush1.msra.mxu0 0.0
    %1693 = vmatprep.subr.mxu0 0.0
    %1694 = vmatpush1.msra.mxu0 0.0
    %1695 = vmatprep.subr.mxu0 0.0
    %1696 = vmatpush1.msra.mxu0 0.0
    %1697 = vmatprep.mubr.f32.mxu0 0.0
    %v1698 = vand.u32 %v421, 4294901760
    %1699 = vmatmul.mubr.f32.gmra.mrb[0].mxu0 %v1698
    %v1700 = vpop.f32.mrb[0].mxu0
    %v1701 = vadd.f32 %v1614, %v1700
    %v1702 = vpop.f32.mrb[0].mxu0
    %1703 = vdwg.mxu0
    %v1704 = vmul.f32 %v1060, %v1701
    %v1706 = vrot.slane %v1704, 1
    %v1708 = vadd.f32 %v1704, %v1706
    %v1710 = vrot.slane %v1701, 7
    %v1712 = vmul.f32 %v1060, %v1710
    %v1713 = vrot.slane %v1701, 1
    %v1715 = vmul.f32 %v1060, %v1713
    %v1717 = vrot.slane %v1715, 7
    %v1719 = vsub.f32 %v1712, %v1717
    %v1720 = vmul.f32 %v1060, %v1060
    %v1722 = vrot.slane %v1720, 1
    %v1724 = vadd.f32 %v1720, %v1722
    %v1725 = vsub.f32 %v1708, %v1724
    %v1726 = vmul.f32 %v291, %v1725
    %v1727 = vmul.f32 %v297, %v1719
    %v1729 = vrot.slane %v1727, 1
    %v1731 = vadd.f32 %v1726, %v1729
    %v1733 = vrot.slane %v1719, 1
    %v1735 = vmul.f32 %v291, %v1733
    %v1737 = vrot.slane %v1725, 7
    %v1739 = vmul.f32 %v297, %v1737
    %v1741 = vrot.slane %v1739, 1
    %v1743 = vsub.f32 %v1735, %v1741
    %v1745 = vrot.slane %v1743, 7
    %vm1747 = vcmask 1040384
    %v1748 = vsel %vm1747, %v1731, %v1745
    %v1749 = vld [vmem:[#allocation3] sm:$0x3]
    %1750 = vmatprep.subr.mxu0 0.0
    %v1751 = vand.u32 %v353, 4294901760
    %1752 = vmatpush1.xpose.msra.mxu0 %v1751
    %1753 = vmatprep.subr.mxu0 0.0
    %v1754 = vand.u32 %v354, 4294901760
    %1755 = vmatpush1.xpose.msra.mxu0 %v1754
    %1756 = vmatprep.subr.mxu0 0.0
    %v1757 = vand.u32 %v355, 4294901760
    %1758 = vmatpush1.xpose.msra.mxu0 %v1757
    %1759 = vmatprep.subr.mxu0 0.0
    %v1760 = vand.u32 %v356, 4294901760
    %1761 = vmatpush1.xpose.msra.mxu0 %v1760
    %1762 = vmatprep.subr.mxu0 0.0
    %v1763 = vand.u32 %v357, 4294901760
    %1764 = vmatpush1.xpose.msra.mxu0 %v1763
    %1765 = vmatprep.subr.mxu0 0.0
    %v1766 = vand.u32 %v358, 4294901760
    %1767 = vmatpush1.xpose.msra.mxu0 %v1766
    %1768 = vmatprep.subr.mxu0 0.0
    %v1769 = vand.u32 %v359, 4294901760
    %1770 = vmatpush1.xpose.msra.mxu0 %v1769
    %1771 = vmatprep.subr.mxu0 0.0
    %v1772 = vand.u32 %v360, 4294901760
    %1773 = vmatpush1.xpose.msra.mxu0 %v1772
    %1774 = vmatprep.subr.mxu0 0.0
    %v1775 = vand.u32 %v361, 4294901760
    %1776 = vmatpush1.xpose.msra.mxu0 %v1775
    %1777 = vmatprep.subr.mxu0 0.0
    %v1778 = vand.u32 %v362, 4294901760
    %1779 = vmatpush1.xpose.msra.mxu0 %v1778
    %1780 = vmatprep.subr.mxu0 0.0
    %v1781 = vand.u32 %v363, 4294901760
    %1782 = vmatpush1.xpose.msra.mxu0 %v1781
    %1783 = vmatprep.subr.mxu0 0.0
    %v1784 = vand.u32 %v364, 4294901760
    %1785 = vmatpush1.xpose.msra.mxu0 %v1784
    %1786 = vmatprep.subr.mxu0 0.0
    %v1787 = vand.u32 %v365, 4294901760
    %1788 = vmatpush1.xpose.msra.mxu0 %v1787
    %1789 = vmatprep.subr.mxu0 0.0
    %v1790 = vand.u32 %v366, 4294901760
    %1791 = vmatpush1.xpose.msra.mxu0 %v1790
    %1792 = vmatprep.subr.mxu0 0.0
    %v1793 = vand.u32 %v367, 4294901760
    %1794 = vmatpush1.xpose.msra.mxu0 %v1793
    %1795 = vmatprep.subr.mxu0 0.0
    %v1796 = vand.u32 %v368, 4294901760
    %1797 = vmatpush1.xpose.msra.mxu0 %v1796
    %1798 = vmatprep.subr.mxu0 0.0
    %1799 = vmatpush1.xpose.msra.mxu0 0.0
    %1800 = vmatprep.subr.mxu0 0.0
    %1801 = vmatpush1.xpose.msra.mxu0 0.0
    %1802 = vmatprep.subr.mxu0 0.0
    %1803 = vmatpush1.xpose.msra.mxu0 0.0
    %1804 = vmatprep.subr.mxu0 0.0
    %1805 = vmatpush1.xpose.msra.mxu0 0.0
    %1806 = vmatprep.subr.mxu0 0.0
    %1807 = vmatpush1.xpose.msra.mxu0 0.0
    %1808 = vmatprep.subr.mxu0 0.0
    %1809 = vmatpush1.xpose.msra.mxu0 0.0
    %1810 = vmatprep.subr.mxu0 0.0
    %1811 = vmatpush1.xpose.msra.mxu0 0.0
    %1812 = vmatprep.subr.mxu0 0.0
    %1813 = vmatpush1.xpose.msra.mxu0 0.0
    %1814 = vmatprep.subr.mxu0 0.0
    %1815 = vmatpush1.xpose.msra.mxu0 0.0
    %1816 = vmatprep.subr.mxu0 0.0
    %1817 = vmatpush1.xpose.msra.mxu0 0.0
    %1818 = vmatprep.subr.mxu0 0.0
    %1819 = vmatpush1.xpose.msra.mxu0 0.0
    %1820 = vmatprep.subr.mxu0 0.0
    %1821 = vmatpush1.xpose.msra.mxu0 0.0
    %1822 = vmatprep.subr.mxu0 0.0
    %1823 = vmatpush1.xpose.msra.mxu0 0.0
    %1824 = vmatprep.subr.mxu0 0.0
    %1825 = vmatpush1.xpose.msra.mxu0 0.0
    %1826 = vmatprep.subr.mxu0 0.0
    %1827 = vmatpush1.xpose.msra.mxu0 0.0
    %1828 = vmatprep.subr.mxu0 0.0
    %1829 = vmatpush1.xpose.msra.mxu0 0.0
    %1830 = vmatprep.mubr.f32.mxu0 0.0
    %v1831 = vand.u32 %v1748, 4294901760
    %v1832 = vsub.f32 %v1748, %v1831
    %v1833 = vand.u32 %v1832, 4294901760
    %v1834 = vsub.f32 %v1832, %v1833
    %v1835 = vand.u32 %v1834, 4294901760
    %1836 = vmatmul.mubr.f32.gmra.mrb[0].mxu0 %v1835
    %v1837 = vpop.f32.mrb[0].mxu0
    %v1838 = vadd.f32 0.0, %v1837
    %v1839 = vpop.f32.mrb[0].mxu0
    %1840 = vdwg.mxu0
    %1841 = vmatprep.subr.mxu0 0.0
    %v1842 = vand.u32 %v353, 4294901760
    %v1843 = vsub.f32 %v353, %v1842
    %v1844 = vand.u32 %v1843, 4294901760
    %v1845 = vsub.f32 %v1843, %v1844
    %v1846 = vand.u32 %v1845, 4294901760
    %1847 = vmatpush1.xpose.msra.mxu0 %v1846
    %1848 = vmatprep.subr.mxu0 0.0
    %v1849 = vand.u32 %v354, 4294901760
    %v1850 = vsub.f32 %v354, %v1849
    %v1851 = vand.u32 %v1850, 4294901760
    %v1852 = vsub.f32 %v1850, %v1851
    %v1853 = vand.u32 %v1852, 4294901760
    %1854 = vmatpush1.xpose.msra.mxu0 %v1853
    %1855 = vmatprep.subr.mxu0 0.0
    %v1856 = vand.u32 %v355, 4294901760
    %v1857 = vsub.f32 %v355, %v1856
    %v1858 = vand.u32 %v1857, 4294901760
    %v1859 = vsub.f32 %v1857, %v1858
    %v1860 = vand.u32 %v1859, 4294901760
    %1861 = vmatpush1.xpose.msra.mxu0 %v1860
    %1862 = vmatprep.subr.mxu0 0.0
    %v1863 = vand.u32 %v356, 4294901760
    %v1864 = vsub.f32 %v356, %v1863
    %v1865 = vand.u32 %v1864, 4294901760
    %v1866 = vsub.f32 %v1864, %v1865
    %v1867 = vand.u32 %v1866, 4294901760
    %1868 = vmatpush1.xpose.msra.mxu0 %v1867
    %1869 = vmatprep.subr.mxu0 0.0
    %v1870 = vand.u32 %v357, 4294901760
    %v1871 = vsub.f32 %v357, %v1870
    %v1872 = vand.u32 %v1871, 4294901760
    %v1873 = vsub.f32 %v1871, %v1872
    %v1874 = vand.u32 %v1873, 4294901760
    %1875 = vmatpush1.xpose.msra.mxu0 %v1874
    %1876 = vmatprep.subr.mxu0 0.0
    %v1877 = vand.u32 %v358, 4294901760
    %v1878 = vsub.f32 %v358, %v1877
    %v1879 = vand.u32 %v1878, 4294901760
    %v1880 = vsub.f32 %v1878, %v1879
    %v1881 = vand.u32 %v1880, 4294901760
    %1882 = vmatpush1.xpose.msra.mxu0 %v1881
    %1883 = vmatprep.subr.mxu0 0.0
    %v1884 = vand.u32 %v359, 4294901760
    %v1885 = vsub.f32 %v359, %v1884
    %v1886 = vand.u32 %v1885, 4294901760
    %v1887 = vsub.f32 %v1885, %v1886
    %v1888 = vand.u32 %v1887, 4294901760
    %1889 = vmatpush1.xpose.msra.mxu0 %v1888
    %1890 = vmatprep.subr.mxu0 0.0
    %v1891 = vand.u32 %v360, 4294901760
    %v1892 = vsub.f32 %v360, %v1891
    %v1893 = vand.u32 %v1892, 4294901760
    %v1894 = vsub.f32 %v1892, %v1893
    %v1895 = vand.u32 %v1894, 4294901760
    %1896 = vmatpush1.xpose.msra.mxu0 %v1895
    %1897 = vmatprep.subr.mxu0 0.0
    %v1898 = vand.u32 %v361, 4294901760
    %v1899 = vsub.f32 %v361, %v1898
    %v1900 = vand.u32 %v1899, 4294901760
    %v1901 = vsub.f32 %v1899, %v1900
    %v1902 = vand.u32 %v1901, 4294901760
    %1903 = vmatpush1.xpose.msra.mxu0 %v1902
    %1904 = vmatprep.subr.mxu0 0.0
    %v1905 = vand.u32 %v362, 4294901760
    %v1906 = vsub.f32 %v362, %v1905
    %v1907 = vand.u32 %v1906, 4294901760
    %v1908 = vsub.f32 %v1906, %v1907
    %v1909 = vand.u32 %v1908, 4294901760
    %1910 = vmatpush1.xpose.msra.mxu0 %v1909
    %1911 = vmatprep.subr.mxu0 0.0
    %v1912 = vand.u32 %v363, 4294901760
    %v1913 = vsub.f32 %v363, %v1912
    %v1914 = vand.u32 %v1913, 4294901760
    %v1915 = vsub.f32 %v1913, %v1914
    %v1916 = vand.u32 %v1915, 4294901760
    %1917 = vmatpush1.xpose.msra.mxu0 %v1916
    %1918 = vmatprep.subr.mxu0 0.0
    %v1919 = vand.u32 %v364, 4294901760
    %v1920 = vsub.f32 %v364, %v1919
    %v1921 = vand.u32 %v1920, 4294901760
    %v1922 = vsub.f32 %v1920, %v1921
    %v1923 = vand.u32 %v1922, 4294901760
    %1924 = vmatpush1.xpose.msra.mxu0 %v1923
    %1925 = vmatprep.subr.mxu0 0.0
    %v1926 = vand.u32 %v365, 4294901760
    %v1927 = vsub.f32 %v365, %v1926
    %v1928 = vand.u32 %v1927, 4294901760
    %v1929 = vsub.f32 %v1927, %v1928
    %v1930 = vand.u32 %v1929, 4294901760
    %1931 = vmatpush1.xpose.msra.mxu0 %v1930
    %1932 = vmatprep.subr.mxu0 0.0
    %v1933 = vand.u32 %v366, 4294901760
    %v1934 = vsub.f32 %v366, %v1933
    %v1935 = vand.u32 %v1934, 4294901760
    %v1936 = vsub.f32 %v1934, %v1935
    %v1937 = vand.u32 %v1936, 4294901760
    %1938 = vmatpush1.xpose.msra.mxu0 %v1937
    %1939 = vmatprep.subr.mxu0 0.0
    %v1940 = vand.u32 %v367, 4294901760
    %v1941 = vsub.f32 %v367, %v1940
    %v1942 = vand.u32 %v1941, 4294901760
    %v1943 = vsub.f32 %v1941, %v1942
    %v1944 = vand.u32 %v1943, 4294901760
    %1945 = vmatpush1.xpose.msra.mxu0 %v1944
    %1946 = vmatprep.subr.mxu0 0.0
    %v1947 = vand.u32 %v368, 4294901760
    %v1948 = vsub.f32 %v368, %v1947
    %v1949 = vand.u32 %v1948, 4294901760
    %v1950 = vsub.f32 %v1948, %v1949
    %v1951 = vand.u32 %v1950, 4294901760
    %1952 = vmatpush1.xpose.msra.mxu0 %v1951
    %1953 = vmatprep.subr.mxu0 0.0
    %1954 = vmatpush1.xpose.msra.mxu0 0.0
    %1955 = vmatprep.subr.mxu0 0.0
    %1956 = vmatpush1.xpose.msra.mxu0 0.0
    %1957 = vmatprep.subr.mxu0 0.0
    %1958 = vmatpush1.xpose.msra.mxu0 0.0
    %1959 = vmatprep.subr.mxu0 0.0
    %1960 = vmatpush1.xpose.msra.mxu0 0.0
    %1961 = vmatprep.subr.mxu0 0.0
    %1962 = vmatpush1.xpose.msra.mxu0 0.0
    %1963 = vmatprep.subr.mxu0 0.0
    %1964 = vmatpush1.xpose.msra.mxu0 0.0
    %1965 = vmatprep.subr.mxu0 0.0
    %1966 = vmatpush1.xpose.msra.mxu0 0.0
    %1967 = vmatprep.subr.mxu0 0.0
    %1968 = vmatpush1.xpose.msra.mxu0 0.0
    %1969 = vmatprep.subr.mxu0 0.0
    %1970 = vmatpush1.xpose.msra.mxu0 0.0
    %1971 = vmatprep.subr.mxu0 0.0
    %1972 = vmatpush1.xpose.msra.mxu0 0.0
    %1973 = vmatprep.subr.mxu0 0.0
    %1974 = vmatpush1.xpose.msra.mxu0 0.0
    %1975 = vmatprep.subr.mxu0 0.0
    %1976 = vmatpush1.xpose.msra.mxu0 0.0
    %1977 = vmatprep.subr.mxu0 0.0
    %1978 = vmatpush1.xpose.msra.mxu0 0.0
    %1979 = vmatprep.subr.mxu0 0.0
    %1980 = vmatpush1.xpose.msra.mxu0 0.0
    %1981 = vmatprep.subr.mxu0 0.0
    %1982 = vmatpush1.xpose.msra.mxu0 0.0
    %1983 = vmatprep.subr.mxu0 0.0
    %1984 = vmatpush1.xpose.msra.mxu0 0.0
    %1985 = vmatprep.mubr.f32.mxu0 0.0
    %v1986 = vand.u32 %v1748, 4294901760
    %1987 = vmatmul.mubr.f32.gmra.mrb[0].mxu0 %v1986
    %v1988 = vpop.f32.mrb[0].mxu0
    %v1989 = vadd.f32 %v1838, %v1988
    %v1990 = vpop.f32.mrb[0].mxu0
    %1991 = vdwg.mxu0
    %1992 = vmatprep.subr.mxu0 0.0
    %v1993 = vand.u32 %v353, 4294901760
    %v1994 = vsub.f32 %v353, %v1993
    %1995 = vmatpush1.xpose.msra.mxu0 %v1994
    %1996 = vmatprep.subr.mxu0 0.0
    %v1997 = vand.u32 %v354, 4294901760
    %v1998 = vsub.f32 %v354, %v1997
    %1999 = vmatpush1.xpose.msra.mxu0 %v1998
    %2000 = vmatprep.subr.mxu0 0.0
    %v2001 = vand.u32 %v355, 4294901760
    %v2002 = vsub.f32 %v355, %v2001
    %2003 = vmatpush1.xpose.msra.mxu0 %v2002
    %2004 = vmatprep.subr.mxu0 0.0
    %v2005 = vand.u32 %v356, 4294901760
    %v2006 = vsub.f32 %v356, %v2005
    %2007 = vmatpush1.xpose.msra.mxu0 %v2006
    %2008 = vmatprep.subr.mxu0 0.0
    %v2009 = vand.u32 %v357, 4294901760
    %v2010 = vsub.f32 %v357, %v2009
    %2011 = vmatpush1.xpose.msra.mxu0 %v2010
    %2012 = vmatprep.subr.mxu0 0.0
    %v2013 = vand.u32 %v358, 4294901760
    %v2014 = vsub.f32 %v358, %v2013
    %2015 = vmatpush1.xpose.msra.mxu0 %v2014
    %2016 = vmatprep.subr.mxu0 0.0
    %v2017 = vand.u32 %v359, 4294901760
    %v2018 = vsub.f32 %v359, %v2017
    %2019 = vmatpush1.xpose.msra.mxu0 %v2018
    %2020 = vmatprep.subr.mxu0 0.0
    %v2021 = vand.u32 %v360, 4294901760
    %v2022 = vsub.f32 %v360, %v2021
    %2023 = vmatpush1.xpose.msra.mxu0 %v2022
    %2024 = vmatprep.subr.mxu0 0.0
    %v2025 = vand.u32 %v361, 4294901760
    %v2026 = vsub.f32 %v361, %v2025
    %2027 = vmatpush1.xpose.msra.mxu0 %v2026
    %2028 = vmatprep.subr.mxu0 0.0
    %v2029 = vand.u32 %v362, 4294901760
    %v2030 = vsub.f32 %v362, %v2029
    %2031 = vmatpush1.xpose.msra.mxu0 %v2030
    %2032 = vmatprep.subr.mxu0 0.0
    %v2033 = vand.u32 %v363, 4294901760
    %v2034 = vsub.f32 %v363, %v2033
    %2035 = vmatpush1.xpose.msra.mxu0 %v2034
    %2036 = vmatprep.subr.mxu0 0.0
    %v2037 = vand.u32 %v364, 4294901760
    %v2038 = vsub.f32 %v364, %v2037
    %2039 = vmatpush1.xpose.msra.mxu0 %v2038
    %2040 = vmatprep.subr.mxu0 0.0
    %v2041 = vand.u32 %v365, 4294901760
    %v2042 = vsub.f32 %v365, %v2041
    %2043 = vmatpush1.xpose.msra.mxu0 %v2042
    %2044 = vmatprep.subr.mxu0 0.0
    %v2045 = vand.u32 %v366, 4294901760
    %v2046 = vsub.f32 %v366, %v2045
    %2047 = vmatpush1.xpose.msra.mxu0 %v2046
    %2048 = vmatprep.subr.mxu0 0.0
    %v2049 = vand.u32 %v367, 4294901760
    %v2050 = vsub.f32 %v367, %v2049
    %2051 = vmatpush1.xpose.msra.mxu0 %v2050
    %2052 = vmatprep.subr.mxu0 0.0
    %v2053 = vand.u32 %v368, 4294901760
    %v2054 = vsub.f32 %v368, %v2053
    %2055 = vmatpush1.xpose.msra.mxu0 %v2054
    %2056 = vmatprep.subr.mxu0 0.0
    %2057 = vmatpush1.xpose.msra.mxu0 0.0
    %2058 = vmatprep.subr.mxu0 0.0
    %2059 = vmatpush1.xpose.msra.mxu0 0.0
    %2060 = vmatprep.subr.mxu0 0.0
    %2061 = vmatpush1.xpose.msra.mxu0 0.0
    %2062 = vmatprep.subr.mxu0 0.0
    %2063 = vmatpush1.xpose.msra.mxu0 0.0
    %2064 = vmatprep.subr.mxu0 0.0
    %2065 = vmatpush1.xpose.msra.mxu0 0.0
    %2066 = vmatprep.subr.mxu0 0.0
    %2067 = vmatpush1.xpose.msra.mxu0 0.0
    %2068 = vmatprep.subr.mxu0 0.0
    %2069 = vmatpush1.xpose.msra.mxu0 0.0
    %2070 = vmatprep.subr.mxu0 0.0
    %2071 = vmatpush1.xpose.msra.mxu0 0.0
    %2072 = vmatprep.subr.mxu0 0.0
    %2073 = vmatpush1.xpose.msra.mxu0 0.0
    %2074 = vmatprep.subr.mxu0 0.0
    %2075 = vmatpush1.xpose.msra.mxu0 0.0
    %2076 = vmatprep.subr.mxu0 0.0
    %2077 = vmatpush1.xpose.msra.mxu0 0.0
    %2078 = vmatprep.subr.mxu0 0.0
    %2079 = vmatpush1.xpose.msra.mxu0 0.0
    %2080 = vmatprep.subr.mxu0 0.0
    %2081 = vmatpush1.xpose.msra.mxu0 0.0
    %2082 = vmatprep.subr.mxu0 0.0
    %2083 = vmatpush1.xpose.msra.mxu0 0.0
    %2084 = vmatprep.subr.mxu0 0.0
    %2085 = vmatpush1.xpose.msra.mxu0 0.0
    %2086 = vmatprep.subr.mxu0 0.0
    %2087 = vmatpush1.xpose.msra.mxu0 0.0
    %2088 = vmatprep.mubr.f32.mxu0 0.0
    %v2089 = vand.u32 %v1748, 4294901760
    %v2090 = vsub.f32 %v1748, %v2089
    %2091 = vmatmul.mubr.f32.gmra.mrb[0].mxu0 %v2090
    %v2092 = vpop.f32.mrb[0].mxu0
    %v2093 = vadd.f32 %v1989, %v2092
    %v2094 = vpop.f32.mrb[0].mxu0
    %2095 = vdwg.mxu0
    %2096 = vmatprep.subr.mxu0 0.0
    %v2097 = vand.u32 %v353, 4294901760
    %2098 = vmatpush1.xpose.msra.mxu0 %v2097
    %2099 = vmatprep.subr.mxu0 0.0
    %v2100 = vand.u32 %v354, 4294901760
    %2101 = vmatpush1.xpose.msra.mxu0 %v2100
    %2102 = vmatprep.subr.mxu0 0.0
    %v2103 = vand.u32 %v355, 4294901760
    %2104 = vmatpush1.xpose.msra.mxu0 %v2103
    %2105 = vmatprep.subr.mxu0 0.0
    %v2106 = vand.u32 %v356, 4294901760
    %2107 = vmatpush1.xpose.msra.mxu0 %v2106
    %2108 = vmatprep.subr.mxu0 0.0
    %v2109 = vand.u32 %v357, 4294901760
    %2110 = vmatpush1.xpose.msra.mxu0 %v2109
    %2111 = vmatprep.subr.mxu0 0.0
    %v2112 = vand.u32 %v358, 4294901760
    %2113 = vmatpush1.xpose.msra.mxu0 %v2112
    %2114 = vmatprep.subr.mxu0 0.0
    %v2115 = vand.u32 %v359, 4294901760
    %2116 = vmatpush1.xpose.msra.mxu0 %v2115
    %2117 = vmatprep.subr.mxu0 0.0
    %v2118 = vand.u32 %v360, 4294901760
    %2119 = vmatpush1.xpose.msra.mxu0 %v2118
    %2120 = vmatprep.subr.mxu0 0.0
    %v2121 = vand.u32 %v361, 4294901760
    %2122 = vmatpush1.xpose.msra.mxu0 %v2121
    %2123 = vmatprep.subr.mxu0 0.0
    %v2124 = vand.u32 %v362, 4294901760
    %2125 = vmatpush1.xpose.msra.mxu0 %v2124
    %2126 = vmatprep.subr.mxu0 0.0
    %v2127 = vand.u32 %v363, 4294901760
    %2128 = vmatpush1.xpose.msra.mxu0 %v2127
    %2129 = vmatprep.subr.mxu0 0.0
    %v2130 = vand.u32 %v364, 4294901760
    %2131 = vmatpush1.xpose.msra.mxu0 %v2130
    %2132 = vmatprep.subr.mxu0 0.0
    %v2133 = vand.u32 %v365, 4294901760
    %2134 = vmatpush1.xpose.msra.mxu0 %v2133
    %2135 = vmatprep.subr.mxu0 0.0
    %v2136 = vand.u32 %v366, 4294901760
    %2137 = vmatpush1.xpose.msra.mxu0 %v2136
    %2138 = vmatprep.subr.mxu0 0.0
    %v2139 = vand.u32 %v367, 4294901760
    %2140 = vmatpush1.xpose.msra.mxu0 %v2139
    %2141 = vmatprep.subr.mxu0 0.0
    %v2142 = vand.u32 %v368, 4294901760
    %2143 = vmatpush1.xpose.msra.mxu0 %v2142
    %2144 = vmatprep.subr.mxu0 0.0
    %2145 = vmatpush1.xpose.msra.mxu0 0.0
    %2146 = vmatprep.subr.mxu0 0.0
    %2147 = vmatpush1.xpose.msra.mxu0 0.0
    %2148 = vmatprep.subr.mxu0 0.0
    %2149 = vmatpush1.xpose.msra.mxu0 0.0
    %2150 = vmatprep.subr.mxu0 0.0
    %2151 = vmatpush1.xpose.msra.mxu0 0.0
    %2152 = vmatprep.subr.mxu0 0.0
    %2153 = vmatpush1.xpose.msra.mxu0 0.0
    %2154 = vmatprep.subr.mxu0 0.0
    %2155 = vmatpush1.xpose.msra.mxu0 0.0
    %2156 = vmatprep.subr.mxu0 0.0
    %2157 = vmatpush1.xpose.msra.mxu0 0.0
    %2158 = vmatprep.subr.mxu0 0.0
    %2159 = vmatpush1.xpose.msra.mxu0 0.0
    %2160 = vmatprep.subr.mxu0 0.0
    %2161 = vmatpush1.xpose.msra.mxu0 0.0
    %2162 = vmatprep.subr.mxu0 0.0
    %2163 = vmatpush1.xpose.msra.mxu0 0.0
    %2164 = vmatprep.subr.mxu0 0.0
    %2165 = vmatpush1.xpose.msra.mxu0 0.0
    %2166 = vmatprep.subr.mxu0 0.0
    %2167 = vmatpush1.xpose.msra.mxu0 0.0
    %2168 = vmatprep.subr.mxu0 0.0
    %2169 = vmatpush1.xpose.msra.mxu0 0.0
    %2170 = vmatprep.subr.mxu0 0.0
    %2171 = vmatpush1.xpose.msra.mxu0 0.0
    %2172 = vmatprep.subr.mxu0 0.0
    %2173 = vmatpush1.xpose.msra.mxu0 0.0
    %2174 = vmatprep.subr.mxu0 0.0
    %2175 = vmatpush1.xpose.msra.mxu0 0.0
    %2176 = vmatprep.mubr.f32.mxu0 0.0
    %v2177 = vand.u32 %v1748, 4294901760
    %v2178 = vsub.f32 %v1748, %v2177
    %v2179 = vand.u32 %v2178, 4294901760
    %2180 = vmatmul.mubr.f32.gmra.mrb[0].mxu0 %v2179
    %v2181 = vpop.f32.mrb[0].mxu0
    %v2182 = vadd.f32 %v2093, %v2181
    %v2183 = vpop.f32.mrb[0].mxu0
    %2184 = vdwg.mxu0
    %2185 = vmatprep.subr.mxu0 0.0
    %v2186 = vand.u32 %v353, 4294901760
    %v2187 = vsub.f32 %v353, %v2186
    %v2188 = vand.u32 %v2187, 4294901760
    %2189 = vmatpush1.xpose.msra.mxu0 %v2188
    %2190 = vmatprep.subr.mxu0 0.0
    %v2191 = vand.u32 %v354, 4294901760
    %v2192 = vsub.f32 %v354, %v2191
    %v2193 = vand.u32 %v2192, 4294901760
    %2194 = vmatpush1.xpose.msra.mxu0 %v2193
    %2195 = vmatprep.subr.mxu0 0.0
    %v2196 = vand.u32 %v355, 4294901760
    %v2197 = vsub.f32 %v355, %v2196
    %v2198 = vand.u32 %v2197, 4294901760
    %2199 = vmatpush1.xpose.msra.mxu0 %v2198
    %2200 = vmatprep.subr.mxu0 0.0
    %v2201 = vand.u32 %v356, 4294901760
    %v2202 = vsub.f32 %v356, %v2201
    %v2203 = vand.u32 %v2202, 4294901760
    %2204 = vmatpush1.xpose.msra.mxu0 %v2203
    %2205 = vmatprep.subr.mxu0 0.0
    %v2206 = vand.u32 %v357, 4294901760
    %v2207 = vsub.f32 %v357, %v2206
    %v2208 = vand.u32 %v2207, 4294901760
    %2209 = vmatpush1.xpose.msra.mxu0 %v2208
    %2210 = vmatprep.subr.mxu0 0.0
    %v2211 = vand.u32 %v358, 4294901760
    %v2212 = vsub.f32 %v358, %v2211
    %v2213 = vand.u32 %v2212, 4294901760
    %2214 = vmatpush1.xpose.msra.mxu0 %v2213
    %2215 = vmatprep.subr.mxu0 0.0
    %v2216 = vand.u32 %v359, 4294901760
    %v2217 = vsub.f32 %v359, %v2216
    %v2218 = vand.u32 %v2217, 4294901760
    %2219 = vmatpush1.xpose.msra.mxu0 %v2218
    %2220 = vmatprep.subr.mxu0 0.0
    %v2221 = vand.u32 %v360, 4294901760
    %v2222 = vsub.f32 %v360, %v2221
    %v2223 = vand.u32 %v2222, 4294901760
    %2224 = vmatpush1.xpose.msra.mxu0 %v2223
    %2225 = vmatprep.subr.mxu0 0.0
    %v2226 = vand.u32 %v361, 4294901760
    %v2227 = vsub.f32 %v361, %v2226
    %v2228 = vand.u32 %v2227, 4294901760
    %2229 = vmatpush1.xpose.msra.mxu0 %v2228
    %2230 = vmatprep.subr.mxu0 0.0
    %v2231 = vand.u32 %v362, 4294901760
    %v2232 = vsub.f32 %v362, %v2231
    %v2233 = vand.u32 %v2232, 4294901760
    %2234 = vmatpush1.xpose.msra.mxu0 %v2233
    %2235 = vmatprep.subr.mxu0 0.0
    %v2236 = vand.u32 %v363, 4294901760
    %v2237 = vsub.f32 %v363, %v2236
    %v2238 = vand.u32 %v2237, 4294901760
    %2239 = vmatpush1.xpose.msra.mxu0 %v2238
    %2240 = vmatprep.subr.mxu0 0.0
    %v2241 = vand.u32 %v364, 4294901760
    %v2242 = vsub.f32 %v364, %v2241
    %v2243 = vand.u32 %v2242, 4294901760
    %2244 = vmatpush1.xpose.msra.mxu0 %v2243
    %2245 = vmatprep.subr.mxu0 0.0
    %v2246 = vand.u32 %v365, 4294901760
    %v2247 = vsub.f32 %v365, %v2246
    %v2248 = vand.u32 %v2247, 4294901760
    %2249 = vmatpush1.xpose.msra.mxu0 %v2248
    %2250 = vmatprep.subr.mxu0 0.0
    %v2251 = vand.u32 %v366, 4294901760
    %v2252 = vsub.f32 %v366, %v2251
    %v2253 = vand.u32 %v2252, 4294901760
    %2254 = vmatpush1.xpose.msra.mxu0 %v2253
    %2255 = vmatprep.subr.mxu0 0.0
    %v2256 = vand.u32 %v367, 4294901760
    %v2257 = vsub.f32 %v367, %v2256
    %v2258 = vand.u32 %v2257, 4294901760
    %2259 = vmatpush1.xpose.msra.mxu0 %v2258
    %2260 = vmatprep.subr.mxu0 0.0
    %v2261 = vand.u32 %v368, 4294901760
    %v2262 = vsub.f32 %v368, %v2261
    %v2263 = vand.u32 %v2262, 4294901760
    %2264 = vmatpush1.xpose.msra.mxu0 %v2263
    %2265 = vmatprep.subr.mxu0 0.0
    %2266 = vmatpush1.xpose.msra.mxu0 0.0
    %2267 = vmatprep.subr.mxu0 0.0
    %2268 = vmatpush1.xpose.msra.mxu0 0.0
    %2269 = vmatprep.subr.mxu0 0.0
    %2270 = vmatpush1.xpose.msra.mxu0 0.0
    %2271 = vmatprep.subr.mxu0 0.0
    %2272 = vmatpush1.xpose.msra.mxu0 0.0
    %2273 = vmatprep.subr.mxu0 0.0
    %2274 = vmatpush1.xpose.msra.mxu0 0.0
    %2275 = vmatprep.subr.mxu0 0.0
    %2276 = vmatpush1.xpose.msra.mxu0 0.0
    %2277 = vmatprep.subr.mxu0 0.0
    %2278 = vmatpush1.xpose.msra.mxu0 0.0
    %2279 = vmatprep.subr.mxu0 0.0
    %2280 = vmatpush1.xpose.msra.mxu0 0.0
    %2281 = vmatprep.subr.mxu0 0.0
    %2282 = vmatpush1.xpose.msra.mxu0 0.0
    %2283 = vmatprep.subr.mxu0 0.0
    %2284 = vmatpush1.xpose.msra.mxu0 0.0
    %2285 = vmatprep.subr.mxu0 0.0
    %2286 = vmatpush1.xpose.msra.mxu0 0.0
    %2287 = vmatprep.subr.mxu0 0.0
    %2288 = vmatpush1.xpose.msra.mxu0 0.0
    %2289 = vmatprep.subr.mxu0 0.0
    %2290 = vmatpush1.xpose.msra.mxu0 0.0
    %2291 = vmatprep.subr.mxu0 0.0
    %2292 = vmatpush1.xpose.msra.mxu0 0.0
    %2293 = vmatprep.subr.mxu0 0.0
    %2294 = vmatpush1.xpose.msra.mxu0 0.0
    %2295 = vmatprep.subr.mxu0 0.0
    %2296 = vmatpush1.xpose.msra.mxu0 0.0
    %2297 = vmatprep.mubr.f32.mxu0 0.0
    %v2298 = vand.u32 %v1748, 4294901760
    %2299 = vmatmul.mubr.f32.gmra.mrb[0].mxu0 %v2298
    %v2300 = vpop.f32.mrb[0].mxu0
    %v2301 = vadd.f32 %v2182, %v2300
    %v2302 = vpop.f32.mrb[0].mxu0
    %2303 = vdwg.mxu0
    %2304 = vmatprep.subr.mxu0 0.0
    %v2305 = vand.u32 %v353, 4294901760
    %2306 = vmatpush1.xpose.msra.mxu0 %v2305
    %2307 = vmatprep.subr.mxu0 0.0
    %v2308 = vand.u32 %v354, 4294901760
    %2309 = vmatpush1.xpose.msra.mxu0 %v2308
    %2310 = vmatprep.subr.mxu0 0.0
    %v2311 = vand.u32 %v355, 4294901760
    %2312 = vmatpush1.xpose.msra.mxu0 %v2311
    %2313 = vmatprep.subr.mxu0 0.0
    %v2314 = vand.u32 %v356, 4294901760
    %2315 = vmatpush1.xpose.msra.mxu0 %v2314
    %2316 = vmatprep.subr.mxu0 0.0
    %v2317 = vand.u32 %v357, 4294901760
    %2318 = vmatpush1.xpose.msra.mxu0 %v2317
    %2319 = vmatprep.subr.mxu0 0.0
    %v2320 = vand.u32 %v358, 4294901760
    %2321 = vmatpush1.xpose.msra.mxu0 %v2320
    %2322 = vmatprep.subr.mxu0 0.0
    %v2323 = vand.u32 %v359, 4294901760
    %2324 = vmatpush1.xpose.msra.mxu0 %v2323
    %2325 = vmatprep.subr.mxu0 0.0
    %v2326 = vand.u32 %v360, 4294901760
    %2327 = vmatpush1.xpose.msra.mxu0 %v2326
    %2328 = vmatprep.subr.mxu0 0.0
    %v2329 = vand.u32 %v361, 4294901760
    %2330 = vmatpush1.xpose.msra.mxu0 %v2329
    %2331 = vmatprep.subr.mxu0 0.0
    %v2332 = vand.u32 %v362, 4294901760
    %2333 = vmatpush1.xpose.msra.mxu0 %v2332
    %2334 = vmatprep.subr.mxu0 0.0
    %v2335 = vand.u32 %v363, 4294901760
    %2336 = vmatpush1.xpose.msra.mxu0 %v2335
    %2337 = vmatprep.subr.mxu0 0.0
    %v2338 = vand.u32 %v364, 4294901760
    %2339 = vmatpush1.xpose.msra.mxu0 %v2338
    %2340 = vmatprep.subr.mxu0 0.0
    %v2341 = vand.u32 %v365, 4294901760
    %2342 = vmatpush1.xpose.msra.mxu0 %v2341
    %2343 = vmatprep.subr.mxu0 0.0
    %v2344 = vand.u32 %v366, 4294901760
    %2345 = vmatpush1.xpose.msra.mxu0 %v2344
    %2346 = vmatprep.subr.mxu0 0.0
    %v2347 = vand.u32 %v367, 4294901760
    %2348 = vmatpush1.xpose.msra.mxu0 %v2347
    %2349 = vmatprep.subr.mxu0 0.0
    %v2350 = vand.u32 %v368, 4294901760
    %2351 = vmatpush1.xpose.msra.mxu0 %v2350
    %2352 = vmatprep.subr.mxu0 0.0
    %2353 = vmatpush1.xpose.msra.mxu0 0.0
    %2354 = vmatprep.subr.mxu0 0.0
    %2355 = vmatpush1.xpose.msra.mxu0 0.0
    %2356 = vmatprep.subr.mxu0 0.0
    %2357 = vmatpush1.xpose.msra.mxu0 0.0
    %2358 = vmatprep.subr.mxu0 0.0
    %2359 = vmatpush1.xpose.msra.mxu0 0.0
    %2360 = vmatprep.subr.mxu0 0.0
    %2361 = vmatpush1.xpose.msra.mxu0 0.0
    %2362 = vmatprep.subr.mxu0 0.0
    %2363 = vmatpush1.xpose.msra.mxu0 0.0
    %2364 = vmatprep.subr.mxu0 0.0
    %2365 = vmatpush1.xpose.msra.mxu0 0.0
    %2366 = vmatprep.subr.mxu0 0.0
    %2367 = vmatpush1.xpose.msra.mxu0 0.0
    %2368 = vmatprep.subr.mxu0 0.0
    %2369 = vmatpush1.xpose.msra.mxu0 0.0
    %2370 = vmatprep.subr.mxu0 0.0
    %2371 = vmatpush1.xpose.msra.mxu0 0.0
    %2372 = vmatprep.subr.mxu0 0.0
    %2373 = vmatpush1.xpose.msra.mxu0 0.0
    %2374 = vmatprep.subr.mxu0 0.0
    %2375 = vmatpush1.xpose.msra.mxu0 0.0
    %2376 = vmatprep.subr.mxu0 0.0
    %2377 = vmatpush1.xpose.msra.mxu0 0.0
    %2378 = vmatprep.subr.mxu0 0.0
    %2379 = vmatpush1.xpose.msra.mxu0 0.0
    %2380 = vmatprep.subr.mxu0 0.0
    %2381 = vmatpush1.xpose.msra.mxu0 0.0
    %2382 = vmatprep.subr.mxu0 0.0
    %2383 = vmatpush1.xpose.msra.mxu0 0.0
    %2384 = vmatprep.mubr.f32.mxu0 0.0
    %v2385 = vand.u32 %v1748, 4294901760
    %2386 = vmatmul.mubr.f32.gmra.mrb[0].mxu0 %v2385
    %v2387 = vpop.f32.mrb[0].mxu0
    %v2388 = vadd.f32 %v2301, %v2387
    %v2389 = vpop.f32.mrb[0].mxu0
    %2390 = vdwg.mxu0
    %v2391 = vadd.f32 %v1749, %v2388
    %2392 = vst [vmem:[#allocation3] sm:$0x3] %v2391
    // Predicated region
    $region38: #{tpu_custom_call.1} parent=1 // pred_check
      %p2393 = pneg %p30
    $region39: #{tpu_custom_call.1} parent=1 // pred_check_branch
      %2395 = sbr.rel (%p2393) target = $region41
    $region40: #{tpu_custom_call.1} parent=1 // pred_region
      %v2396 = vld [vmem:[%s0 + $0x2] sm:$0x3]
      %v2397 = vld [vmem:[%s5 + $0x2] sm:$0x3]
      %2399 = vset.pattern.permute.xlu0 0
      %2400 = vperm.xlu0 %2399, %v2397
      %v2401 = vpop.permute.xlu0 %2400
      %v2403 = vmul.f32 %v2396, %v2401
      %v2404 = vld [vmem:[%s4 + $0x2] sm:$0x3]
      %2406 = vset.pattern.permute.xlu0 0
      %2407 = vperm.xlu0 %2406, %v2404
      %v2408 = vpop.permute.xlu0 %2407
      %v2410 = vadd.f32 %v2403, %v2408
      %v2411 = vld [vmem:[#allocation3] sm:$0x3]
      %v2412 = vsub.f32 %v2410, %v2411
      %v2413 = vlaneseq
      %v2414 = vand.u32 %v2413, 127
      %vm2415 = vcmp.lt.s32.totalorder %v2414, 16
      %v2416 = vmul.f32 %v2412, %v2412
      %v2418 = vrot.slane %v2416, 1
      %v2420 = vadd.f32 %v2416, %v2418
      %v2421 = vsel %vm2415, %v2420, 0.0
      %v2422 = vsel %vm1747, %v2421, 0.0
      %2423 = vadd.xlane.f32.xlu0 %v2422
      %v2424 = vpop.xlane.xlu0 %2423
      %v2425 = vrot.slane %v2424, 4
      %v2426 = vadd.f32 %v2424, %v2425
      %v2427 = vrot.slane %v2426, 2
      %v2428 = vadd.f32 %v2426, %v2427
      %v2429 = vrot.slane %v2428, 1
      %v2430 = vadd.f32 %v2428, %v2429
      %s2431 = vtos %v2430
      %v2432 = vrcp.pop 16.0
      %s2433 = vtos %v2432
      %s2434 = smul.f32 %s2431, %s2433
      %v2435 = vld [vmem:[%s0] sm:$0x3f]
      %v2436 = vld [vmem:[%s1] sm:$0x3f]
      %v2437 = vsub.f32 %v2435, %v2436
      %v2438 = vmul.f32 %v2437, %v2437
      %vm2439 = vcmask 1045504
      %v2440 = vsel %vm2439, %v2438, 0.0
      %2441 = vadd.xlane.f32.xlu0 %v2440
      %v2442 = vpop.xlane.xlu0 %2441
      %v2443 = vrot.slane %v2442, 4
      %v2444 = vadd.f32 %v2442, %v2443
      %v2445 = vrot.slane %v2444, 2
      %v2446 = vadd.f32 %v2444, %v2445
      %v2447 = vrot.slane %v2446, 1
      %v2448 = vadd.f32 %v2446, %v2447
      %s2449 = vtos %v2448
      %v2450 = vrcp.pop 96.0
      %s2451 = vtos %v2450
      %s2452 = smul.f32 %s2449, %s2451
      %s2453 = smul.f32 %s2452, 0.5
      %s2454 = smul.f32 %s2434, 0.01
      %s2455 = sadd.f32 %s2453, %s2454
      %v2456 = vstv %s2455
      %vm2457 = vcmask 0
      %2458 = vst.msk [vmem:[#allocation4] sm:$0x1] %vm2457, %v2456
    $region41: #{tpu_custom_call.1} parent=1 // pred_fallthru
      _
    // Predicated region
    $region42: #{tpu_custom_call.1} parent=1 // pred_check
      _
    $region43: #{tpu_custom_call.1} parent=1 // pred_check_branch
      %2460 = sbr.rel (0) target = $region45
    $region44: #{tpu_custom_call.1} parent=1 // pred_region
      %s2462 = ssub.s32 16, 16
      %2463 = vsyncadd [#allocation5], %s2462
      %s2465 = sshll.u32 [#allocation4], 4
      %s2466 = int_to_ptr.vmem [resolvable:$true] %s2465
      %2468 = dma.vmem_to_hbm [thread:$0]  %s2466, 16, %s8, [#allocation5]
    $region45: #{tpu_custom_call.1} parent=1 // pred_fallthru
      _
    // Predicated region
    $region46: #{tpu_custom_call.1} parent=1 // pred_check
      _
    $region47: #{tpu_custom_call.1} parent=1 // pred_check_branch
      %2470 = sbr.rel (0) target = $region49
    $region48: #{tpu_custom_call.1} parent=1 // pred_region
      %2471 = dma.done [#allocation5], 16
    $region49: #{tpu_custom_call.1} parent=1 // pred_fallthru
      _
    %2472 = vsyncpa [#allocation5], 1

</llo_original>
